<compile_context>
chip_gen: v6e
topology: v6e:2x2x1
jax: 0.10.0
libtpu: 0.0.40
codegen_flags: <defaults>
</compile_context>

<pallas_src>
import functools

import jax
import jax.numpy as jnp
from jax import lax
from jax.experimental import pallas as pl
from jax.experimental.pallas import tpu as pltpu


# ----------------------------------------------------------------------------------
# Kernel: soft skeletonization of a (R, Wp) tile that holds many packed images.
#   * along rows:  R // Hp image slabs, each image occupies rows [g*Hp, g*Hp+H)
#   * along lanes: P images side-by-side, image p occupies lanes [p*W, (p+1)*W)
# ----------------------------------------------------------------------------------
def _skeleton_kernel(x_ref, o_ref, *, half_size, iters, H, W, Hp, P):
    R, Wp = x_ref.shape
    dtype = x_ref.dtype
    neg_fill = float(jnp.finfo(dtype).min)   # identity for max  (== torch -inf padding)
    pos_fill = float(jnp.finfo(dtype).max)   # identity for min  (erode = -maxpool(-x))

    # Log-doubling shift schedule covering radius = half_size per axis.
    shifts = []
    r = 0
    while r < half_size:
        s = min(r + 1, half_size - r)
        shifts.append(s)
        r += s

    # Per-pixel coordinate inside its own image.  Images tile with period Hp along rows
    # and period W along lanes.  Built with log2(#images) conditional subtractions only
    # (compare/select/sub), so no integer div/mod lowering is needed.
    def periodic_index(idx, period, count):
        if count <= 1:
            return idx
        k = 1
        while k < count:
            k *= 2
        k //= 2
        while k >= 1:
            thr = period * k
            idx = jnp.where(idx >= thr, idx - thr, idx)
            k //= 2
        return idx

    row = lax.broadcasted_iota(jnp.int32, (R, Wp), 0)
    col = lax.broadcasted_iota(jnp.int32, (R, Wp), 1)
    row_in = periodic_index(row, Hp, R // Hp)
    col_in = periodic_index(col, W, P)

    # Hoisted boundary-validity masks: a shifted read is valid only if it stays inside
    # the reader's own image.  This reproduces MaxPool2d's -inf padding at the image
    # borders and stops lane/sublane rolls from leaking between packed images.
    masks = {}
    for s in sorted(set(shifts)):
        masks[(0, s)] = row_in < (H - s)
        masks[(0, -s)] = row_in >= s
        masks[(1, s)] = col_in < (W - s)
        masks[(1, -s)] = col_in >= s

    def shifted(x, d, axis, fill):
        size = R if axis == 0 else Wp
        rolled = pltpu.roll(x, shift=(-d) % size, axis=axis)
        return jnp.where(masks[(axis, d)], rolled, fill)

    def pool(x, op, fill):
        # Separable (2*half_size+1)^2, stride-1, "same" pooling with `fill` padding.
        # The running result is shifted (log-doubling), so only O(log radius) rolls/axis.
        out = x
        for axis in (0, 1):
            for s in shifts:
                out = op(out, op(shifted(out, s, axis, fill),
                                 shifted(out, -s, axis, fill)))
        return out

    dilate = lambda x: pool(x, jnp.maximum, neg_fill)
    erode = lambda x: pool(x, jnp.minimum, pos_fill)

    img = x_ref[...]
    e = erode(img)              # erode(img0)
    skel = img - dilate(e)      # img0 - open(img0)

    def body(_, carry):
        # Invariant: e_cur == erode of the current img0, i.e. exactly the next img0.
        # Reusing it saves one pool per iteration (2 pools/iter instead of 3).
        e_cur, skel_cur = carry
        e_next = erode(e_cur)
        return e_next, skel_cur + (e_cur - dilate(e_next))

    if iters > 0:
        _, skel = lax.fori_loop(0, iters, body, (e, skel), unroll=True)
    o_ref[...] = skel


# ----------------------------------------------------------------------------------
# Wrapper: pack images densely into lanes/sublanes, call the kernel, unpack.
# ----------------------------------------------------------------------------------
def soft_skeleton(img, *, half_size=1, iters=10):
    """Pallas equivalent of skeleton(half_size, iter).forward(img). Same shape out."""
    orig_shape = img.shape
    orig_dtype = img.dtype
    assert img.ndim >= 2
    H, W = orig_shape[-2], orig_shape[-1]
    x = img.reshape(-1, H, W).astype(jnp.float32)
    B = x.shape[0]

    # Lane packing: put P = floor(128 / W) images side-by-side along the lane axis.
    if W <= 128:
        P = max(1, 128 // W)
        Wp = 128
    else:
        P = 1
        Wp = ((W + 127) // 128) * 128
    Hp = ((H + 7) // 8) * 8            # per-image row slab (sublane aligned)

    B2 = ((B + P - 1) // P) * P
    if B2 != B:
        x = jnp.pad(x, ((0, B2 - B), (0, 0), (0, 0)))
    G = B2 // P                         # number of lane-groups
    # (G, P, H, W) -> (G, H, P*W): the P packed images become adjacent lane strips.
    xp = x.reshape(G, P, H, W).transpose(0, 2, 1, 3).reshape(G, H, P * W)
    xp = jnp.pad(xp, ((0, 0), (0, Hp - H), (0, Wp - P * W)))

    # Stack Bg lane-groups per grid step (amortizes per-step overhead, larger DMAs),
    # capped so the working set stays comfortably inside v5e's scoped VMEM as well.
    max_rows = 512
    Bg = max(1, min(G, max_rows // Hp))
    G2 = ((G + Bg - 1) // Bg) * Bg
    if G2 != G:
        xp = jnp.pad(xp, ((0, G2 - G), (0, 0), (0, 0)))
    rows = G2 * Hp
    x2d = xp.reshape(rows, Wp)
    Rt = Bg * Hp

    # TODO(synk): for very large single images (whole-image tile approaching the scoped
    # VMEM limit, mandatory on v7x's 64 MiB VMEM) tile H with a halo of half_size*(iters+2).
    out2d = pl.pallas_call(
        functools.partial(_skeleton_kernel, half_size=half_size, iters=iters,
                          H=H, W=W, Hp=Hp, P=P),
        out_shape=jax.ShapeDtypeStruct((rows, Wp), jnp.float32),
        grid=(G2 // Bg,),
        in_specs=[pl.BlockSpec((Rt, Wp), lambda i: (i, 0))],
        out_specs=pl.BlockSpec((Rt, Wp), lambda i: (i, 0)),
        compiler_params=pltpu.CompilerParams(
            dimension_semantics=("parallel",),   # batch axis; lets v7x split over 2 TCs
            vmem_limit_bytes=32 * 1024 * 1024),
    )(x2d)

    # Undo the packing.
    out = out2d.reshape(G2, Hp, Wp)[:G, :H, :P * W]
    out = out.reshape(G, H, P, W).transpose(0, 2, 1, 3).reshape(G * P, H, W)
    out = out[:B].reshape(orig_shape).astype(orig_dtype)
    return out


if __name__ == "__main__":
    key = jax.random.PRNGKey(0)

    # Pure-JAX reference with identical MaxPool2d(-inf padding) semantics.
    def ref_skeleton(t, half_size, iters):
        k = 2 * half_size + 1

        def mp(z):
            return lax.reduce_window(
                z, -jnp.inf, lax.max, (1, 1, k, k), (1, 1, 1, 1),
                [(0, 0), (0, 0), (half_size, half_size), (half_size, half_size)])

        erode = lambda z: -mp(-z)
        open_ = lambda z: mp(erode(z))
        img0 = t
        s = img0 - open_(img0)
        for _ in range(iters):
            img0 = erode(img0)
            s = s + (img0 - open_(img0))
        return s

    k1, k2 = jax.random.split(key)

    # Main test (module defaults): (N, C, H, W) = (2, 4, 16, 16) -> 8-wide lane packing.
    half_size, iters = 1, 10
    img = jax.nn.sigmoid(jax.random.normal(k1, (2, 4, 16, 16), jnp.float32))
    skel = soft_skeleton(img, half_size=half_size, iters=iters)
    jax.block_until_ready(skel)
    ref = ref_skeleton(img, half_size, iters)
    assert skel.shape == img.shape
    assert bool(jnp.all(jnp.isfinite(skel)))
    assert bool(jnp.allclose(skel, ref, atol=1e-5, rtol=1e-5)), float(
        jnp.max(jnp.abs(skel - ref)))

    # Secondary test: odd sizes + larger radius -> exercises padding, non-pow2 periodic
    # masks and the multi-shift pooling schedule.
    img2 = jax.nn.sigmoid(jax.random.normal(k2, (1, 3, 13, 20), jnp.float32))
    skel2 = soft_skeleton(img2, half_size=2, iters=4)
    jax.block_until_ready(skel2)
    ref2 = ref_skeleton(img2, 2, 4)
    assert bool(jnp.allclose(skel2, ref2, atol=1e-5, rtol=1e-5)), float(
        jnp.max(jnp.abs(skel2 - ref2)))

    print("KERNEL_OK")
</pallas_src>

<mosaic_0001>
module attributes {stable_mosaic.version = 11 : i64} {
  func.func @_skeleton_kernel(%arg0: i32, %arg1: memref<16x128xf32, #tpu.memory_space<vmem>>, %arg2: memref<16x128xf32, #tpu.memory_space<vmem>>) attributes {dimension_semantics = [#tpu.dimension_semantics<parallel>], iteration_bounds = array<i64: 1>, scalar_prefetch = 0 : i64, scratch_operands = 0 : i64, tpu.core_type = #tpu.core_type<tc>, window_params = [{transform_indices = @transform_0, window_bounds = array<i64: 16, 128>}, {transform_indices = @transform_1, window_bounds = array<i64: 16, 128>}]} {
    %0 = tpu.iota {dimensions = array<i32: 0>} : vector<16x128xi32>
    %1 = tpu.iota {dimensions = array<i32: 1>} : vector<16x128xi32>
    %c64_i32 = arith.constant 64 : i32
    %2 = vector.broadcast %c64_i32 : i32 to vector<16x128xi32>
    %3 = arith.cmpi sge, %1, %2 : vector<16x128xi32>
    %c64_i32_0 = arith.constant 64 : i32
    %4 = vector.broadcast %c64_i32_0 : i32 to vector<16x128xi32>
    %5 = arith.subi %1, %4 : vector<16x128xi32>
    %6 = arith.select %3, %5, %1 : vector<16x128xi1>, vector<16x128xi32>
    %c32_i32 = arith.constant 32 : i32
    %7 = vector.broadcast %c32_i32 : i32 to vector<16x128xi32>
    %8 = arith.cmpi sge, %6, %7 : vector<16x128xi32>
    %c32_i32_1 = arith.constant 32 : i32
    %9 = vector.broadcast %c32_i32_1 : i32 to vector<16x128xi32>
    %10 = arith.subi %6, %9 : vector<16x128xi32>
    %11 = arith.select %8, %10, %6 : vector<16x128xi1>, vector<16x128xi32>
    %c16_i32 = arith.constant 16 : i32
    %12 = vector.broadcast %c16_i32 : i32 to vector<16x128xi32>
    %13 = arith.cmpi sge, %11, %12 : vector<16x128xi32>
    %c16_i32_2 = arith.constant 16 : i32
    %14 = vector.broadcast %c16_i32_2 : i32 to vector<16x128xi32>
    %15 = arith.subi %11, %14 : vector<16x128xi32>
    %16 = arith.select %13, %15, %11 : vector<16x128xi1>, vector<16x128xi32>
    %c15_i32 = arith.constant 15 : i32
    %17 = vector.broadcast %c15_i32 : i32 to vector<16x128xi32>
    %18 = arith.cmpi slt, %0, %17 : vector<16x128xi32>
    %c1_i32 = arith.constant 1 : i32
    %19 = vector.broadcast %c1_i32 : i32 to vector<16x128xi32>
    %20 = arith.cmpi sge, %0, %19 : vector<16x128xi32>
    %c15_i32_3 = arith.constant 15 : i32
    %21 = vector.broadcast %c15_i32_3 : i32 to vector<16x128xi32>
    %22 = arith.cmpi slt, %16, %21 : vector<16x128xi32>
    %c1_i32_4 = arith.constant 1 : i32
    %23 = vector.broadcast %c1_i32_4 : i32 to vector<16x128xi32>
    %24 = arith.cmpi sge, %16, %23 : vector<16x128xi32>
    %c0 = arith.constant 0 : index
    %c0_5 = arith.constant 0 : index
    %25 = vector.load %arg1[%c0, %c0_5] : memref<16x128xf32, #tpu.memory_space<vmem>>, vector<16x128xf32>
    %c15_i32_6 = arith.constant 15 : i32
    %26 = tpu.dynamic_rotate %25 by %c15_i32_6 dim 0 : vector<16x128xf32>, i32 -> vector<16x128xf32>
    %cst = arith.constant 3.40282347E+38 : f32
    %27 = vector.broadcast %cst : f32 to vector<16x128xf32>
    %28 = arith.select %18, %26, %27 : vector<16x128xi1>, vector<16x128xf32>
    %c1_i32_7 = arith.constant 1 : i32
    %29 = tpu.dynamic_rotate %25 by %c1_i32_7 dim 0 : vector<16x128xf32>, i32 -> vector<16x128xf32>
    %cst_8 = arith.constant 3.40282347E+38 : f32
    %30 = vector.broadcast %cst_8 : f32 to vector<16x128xf32>
    %31 = arith.select %20, %29, %30 : vector<16x128xi1>, vector<16x128xf32>
    %32 = arith.minimumf %28, %31 : vector<16x128xf32>
    %33 = arith.minimumf %25, %32 : vector<16x128xf32>
    %c127_i32 = arith.constant 127 : i32
    %34 = tpu.dynamic_rotate %33 by %c127_i32 dim 1 : vector<16x128xf32>, i32 -> vector<16x128xf32>
    %cst_9 = arith.constant 3.40282347E+38 : f32
    %35 = vector.broadcast %cst_9 : f32 to vector<16x128xf32>
    %36 = arith.select %22, %34, %35 : vector<16x128xi1>, vector<16x128xf32>
    %c1_i32_10 = arith.constant 1 : i32
    %37 = tpu.dynamic_rotate %33 by %c1_i32_10 dim 1 : vector<16x128xf32>, i32 -> vector<16x128xf32>
    %cst_11 = arith.constant 3.40282347E+38 : f32
    %38 = vector.broadcast %cst_11 : f32 to vector<16x128xf32>
    %39 = arith.select %24, %37, %38 : vector<16x128xi1>, vector<16x128xf32>
    %40 = arith.minimumf %36, %39 : vector<16x128xf32>
    %41 = arith.minimumf %33, %40 : vector<16x128xf32>
    %c15_i32_12 = arith.constant 15 : i32
    %42 = tpu.dynamic_rotate %41 by %c15_i32_12 dim 0 : vector<16x128xf32>, i32 -> vector<16x128xf32>
    %cst_13 = arith.constant -3.40282347E+38 : f32
    %43 = vector.broadcast %cst_13 : f32 to vector<16x128xf32>
    %44 = arith.select %18, %42, %43 : vector<16x128xi1>, vector<16x128xf32>
    %c1_i32_14 = arith.constant 1 : i32
    %45 = tpu.dynamic_rotate %41 by %c1_i32_14 dim 0 : vector<16x128xf32>, i32 -> vector<16x128xf32>
    %cst_15 = arith.constant -3.40282347E+38 : f32
    %46 = vector.broadcast %cst_15 : f32 to vector<16x128xf32>
    %47 = arith.select %20, %45, %46 : vector<16x128xi1>, vector<16x128xf32>
    %48 = arith.maximumf %44, %47 : vector<16x128xf32>
    %49 = arith.maximumf %41, %48 : vector<16x128xf32>
    %c127_i32_16 = arith.constant 127 : i32
    %50 = tpu.dynamic_rotate %49 by %c127_i32_16 dim 1 : vector<16x128xf32>, i32 -> vector<16x128xf32>
    %cst_17 = arith.constant -3.40282347E+38 : f32
    %51 = vector.broadcast %cst_17 : f32 to vector<16x128xf32>
    %52 = arith.select %22, %50, %51 : vector<16x128xi1>, vector<16x128xf32>
    %c1_i32_18 = arith.constant 1 : i32
    %53 = tpu.dynamic_rotate %49 by %c1_i32_18 dim 1 : vector<16x128xf32>, i32 -> vector<16x128xf32>
    %cst_19 = arith.constant -3.40282347E+38 : f32
    %54 = vector.broadcast %cst_19 : f32 to vector<16x128xf32>
    %55 = arith.select %24, %53, %54 : vector<16x128xi1>, vector<16x128xf32>
    %56 = arith.maximumf %52, %55 : vector<16x128xf32>
    %57 = arith.maximumf %49, %56 : vector<16x128xf32>
    %58 = arith.subf %25, %57 : vector<16x128xf32>
    %c0_i32 = arith.constant 0 : i32
    %c15_i32_20 = arith.constant 15 : i32
    %59 = tpu.dynamic_rotate %41 by %c15_i32_20 dim 0 : vector<16x128xf32>, i32 -> vector<16x128xf32>
    %cst_21 = arith.constant 3.40282347E+38 : f32
    %60 = vector.broadcast %cst_21 : f32 to vector<16x128xf32>
    %61 = arith.select %18, %59, %60 : vector<16x128xi1>, vector<16x128xf32>
    %c1_i32_22 = arith.constant 1 : i32
    %62 = tpu.dynamic_rotate %41 by %c1_i32_22 dim 0 : vector<16x128xf32>, i32 -> vector<16x128xf32>
    %cst_23 = arith.constant 3.40282347E+38 : f32
    %63 = vector.broadcast %cst_23 : f32 to vector<16x128xf32>
    %64 = arith.select %20, %62, %63 : vector<16x128xi1>, vector<16x128xf32>
    %65 = arith.minimumf %61, %64 : vector<16x128xf32>
    %66 = arith.minimumf %41, %65 : vector<16x128xf32>
    %c127_i32_24 = arith.constant 127 : i32
    %67 = tpu.dynamic_rotate %66 by %c127_i32_24 dim 1 : vector<16x128xf32>, i32 -> vector<16x128xf32>
    %cst_25 = arith.constant 3.40282347E+38 : f32
    %68 = vector.broadcast %cst_25 : f32 to vector<16x128xf32>
    %69 = arith.select %22, %67, %68 : vector<16x128xi1>, vector<16x128xf32>
    %c1_i32_26 = arith.constant 1 : i32
    %70 = tpu.dynamic_rotate %66 by %c1_i32_26 dim 1 : vector<16x128xf32>, i32 -> vector<16x128xf32>
    %cst_27 = arith.constant 3.40282347E+38 : f32
    %71 = vector.broadcast %cst_27 : f32 to vector<16x128xf32>
    %72 = arith.select %24, %70, %71 : vector<16x128xi1>, vector<16x128xf32>
    %73 = arith.minimumf %69, %72 : vector<16x128xf32>
    %74 = arith.minimumf %66, %73 : vector<16x128xf32>
    %c15_i32_28 = arith.constant 15 : i32
    %75 = tpu.dynamic_rotate %74 by %c15_i32_28 dim 0 : vector<16x128xf32>, i32 -> vector<16x128xf32>
    %cst_29 = arith.constant -3.40282347E+38 : f32
    %76 = vector.broadcast %cst_29 : f32 to vector<16x128xf32>
    %77 = arith.select %18, %75, %76 : vector<16x128xi1>, vector<16x128xf32>
    %c1_i32_30 = arith.constant 1 : i32
    %78 = tpu.dynamic_rotate %74 by %c1_i32_30 dim 0 : vector<16x128xf32>, i32 -> vector<16x128xf32>
    %cst_31 = arith.constant -3.40282347E+38 : f32
    %79 = vector.broadcast %cst_31 : f32 to vector<16x128xf32>
    %80 = arith.select %20, %78, %79 : vector<16x128xi1>, vector<16x128xf32>
    %81 = arith.maximumf %77, %80 : vector<16x128xf32>
    %82 = arith.maximumf %74, %81 : vector<16x128xf32>
    %c127_i32_32 = arith.constant 127 : i32
    %83 = tpu.dynamic_rotate %82 by %c127_i32_32 dim 1 : vector<16x128xf32>, i32 -> vector<16x128xf32>
    %cst_33 = arith.constant -3.40282347E+38 : f32
    %84 = vector.broadcast %cst_33 : f32 to vector<16x128xf32>
    %85 = arith.select %22, %83, %84 : vector<16x128xi1>, vector<16x128xf32>
    %c1_i32_34 = arith.constant 1 : i32
    %86 = tpu.dynamic_rotate %82 by %c1_i32_34 dim 1 : vector<16x128xf32>, i32 -> vector<16x128xf32>
    %cst_35 = arith.constant -3.40282347E+38 : f32
    %87 = vector.broadcast %cst_35 : f32 to vector<16x128xf32>
    %88 = arith.select %24, %86, %87 : vector<16x128xi1>, vector<16x128xf32>
    %89 = arith.maximumf %85, %88 : vector<16x128xf32>
    %90 = arith.maximumf %82, %89 : vector<16x128xf32>
    %91 = arith.subf %41, %90 : vector<16x128xf32>
    %92 = arith.addf %58, %91 : vector<16x128xf32>
    %c1_i32_36 = arith.constant 1 : i32
    %c15_i32_37 = arith.constant 15 : i32
    %93 = tpu.dynamic_rotate %74 by %c15_i32_37 dim 0 : vector<16x128xf32>, i32 -> vector<16x128xf32>
    %cst_38 = arith.constant 3.40282347E+38 : f32
    %94 = vector.broadcast %cst_38 : f32 to vector<16x128xf32>
    %95 = arith.select %18, %93, %94 : vector<16x128xi1>, vector<16x128xf32>
    %c1_i32_39 = arith.constant 1 : i32
    %96 = tpu.dynamic_rotate %74 by %c1_i32_39 dim 0 : vector<16x128xf32>, i32 -> vector<16x128xf32>
    %cst_40 = arith.constant 3.40282347E+38 : f32
    %97 = vector.broadcast %cst_40 : f32 to vector<16x128xf32>
    %98 = arith.select %20, %96, %97 : vector<16x128xi1>, vector<16x128xf32>
    %99 = arith.minimumf %95, %98 : vector<16x128xf32>
    %100 = arith.minimumf %74, %99 : vector<16x128xf32>
    %c127_i32_41 = arith.constant 127 : i32
    %101 = tpu.dynamic_rotate %100 by %c127_i32_41 dim 1 : vector<16x128xf32>, i32 -> vector<16x128xf32>
    %cst_42 = arith.constant 3.40282347E+38 : f32
    %102 = vector.broadcast %cst_42 : f32 to vector<16x128xf32>
    %103 = arith.select %22, %101, %102 : vector<16x128xi1>, vector<16x128xf32>
    %c1_i32_43 = arith.constant 1 : i32
    %104 = tpu.dynamic_rotate %100 by %c1_i32_43 dim 1 : vector<16x128xf32>, i32 -> vector<16x128xf32>
    %cst_44 = arith.constant 3.40282347E+38 : f32
    %105 = vector.broadcast %cst_44 : f32 to vector<16x128xf32>
    %106 = arith.select %24, %104, %105 : vector<16x128xi1>, vector<16x128xf32>
    %107 = arith.minimumf %103, %106 : vector<16x128xf32>
    %108 = arith.minimumf %100, %107 : vector<16x128xf32>
    %c15_i32_45 = arith.constant 15 : i32
    %109 = tpu.dynamic_rotate %108 by %c15_i32_45 dim 0 : vector<16x128xf32>, i32 -> vector<16x128xf32>
    %cst_46 = arith.constant -3.40282347E+38 : f32
    %110 = vector.broadcast %cst_46 : f32 to vector<16x128xf32>
    %111 = arith.select %18, %109, %110 : vector<16x128xi1>, vector<16x128xf32>
    %c1_i32_47 = arith.constant 1 : i32
    %112 = tpu.dynamic_rotate %108 by %c1_i32_47 dim 0 : vector<16x128xf32>, i32 -> vector<16x128xf32>
    %cst_48 = arith.constant -3.40282347E+38 : f32
    %113 = vector.broadcast %cst_48 : f32 to vector<16x128xf32>
    %114 = arith.select %20, %112, %113 : vector<16x128xi1>, vector<16x128xf32>
    %115 = arith.maximumf %111, %114 : vector<16x128xf32>
    %116 = arith.maximumf %108, %115 : vector<16x128xf32>
    %c127_i32_49 = arith.constant 127 : i32
    %117 = tpu.dynamic_rotate %116 by %c127_i32_49 dim 1 : vector<16x128xf32>, i32 -> vector<16x128xf32>
    %cst_50 = arith.constant -3.40282347E+38 : f32
    %118 = vector.broadcast %cst_50 : f32 to vector<16x128xf32>
    %119 = arith.select %22, %117, %118 : vector<16x128xi1>, vector<16x128xf32>
    %c1_i32_51 = arith.constant 1 : i32
    %120 = tpu.dynamic_rotate %116 by %c1_i32_51 dim 1 : vector<16x128xf32>, i32 -> vector<16x128xf32>
    %cst_52 = arith.constant -3.40282347E+38 : f32
    %121 = vector.broadcast %cst_52 : f32 to vector<16x128xf32>
    %122 = arith.select %24, %120, %121 : vector<16x128xi1>, vector<16x128xf32>
    %123 = arith.maximumf %119, %122 : vector<16x128xf32>
    %124 = arith.maximumf %116, %123 : vector<16x128xf32>
    %125 = arith.subf %74, %124 : vector<16x128xf32>
    %126 = arith.addf %92, %125 : vector<16x128xf32>
    %c2_i32 = arith.constant 2 : i32
    %c15_i32_53 = arith.constant 15 : i32
    %127 = tpu.dynamic_rotate %108 by %c15_i32_53 dim 0 : vector<16x128xf32>, i32 -> vector<16x128xf32>
    %cst_54 = arith.constant 3.40282347E+38 : f32
    %128 = vector.broadcast %cst_54 : f32 to vector<16x128xf32>
    %129 = arith.select %18, %127, %128 : vector<16x128xi1>, vector<16x128xf32>
    %c1_i32_55 = arith.constant 1 : i32
    %130 = tpu.dynamic_rotate %108 by %c1_i32_55 dim 0 : vector<16x128xf32>, i32 -> vector<16x128xf32>
    %cst_56 = arith.constant 3.40282347E+38 : f32
    %131 = vector.broadcast %cst_56 : f32 to vector<16x128xf32>
    %132 = arith.select %20, %130, %131 : vector<16x128xi1>, vector<16x128xf32>
    %133 = arith.minimumf %129, %132 : vector<16x128xf32>
    %134 = arith.minimumf %108, %133 : vector<16x128xf32>
    %c127_i32_57 = arith.constant 127 : i32
    %135 = tpu.dynamic_rotate %134 by %c127_i32_57 dim 1 : vector<16x128xf32>, i32 -> vector<16x128xf32>
    %cst_58 = arith.constant 3.40282347E+38 : f32
    %136 = vector.broadcast %cst_58 : f32 to vector<16x128xf32>
    %137 = arith.select %22, %135, %136 : vector<16x128xi1>, vector<16x128xf32>
    %c1_i32_59 = arith.constant 1 : i32
    %138 = tpu.dynamic_rotate %134 by %c1_i32_59 dim 1 : vector<16x128xf32>, i32 -> vector<16x128xf32>
    %cst_60 = arith.constant 3.40282347E+38 : f32
    %139 = vector.broadcast %cst_60 : f32 to vector<16x128xf32>
    %140 = arith.select %24, %138, %139 : vector<16x128xi1>, vector<16x128xf32>
    %141 = arith.minimumf %137, %140 : vector<16x128xf32>
    %142 = arith.minimumf %134, %141 : vector<16x128xf32>
    %c15_i32_61 = arith.constant 15 : i32
    %143 = tpu.dynamic_rotate %142 by %c15_i32_61 dim 0 : vector<16x128xf32>, i32 -> vector<16x128xf32>
    %cst_62 = arith.constant -3.40282347E+38 : f32
    %144 = vector.broadcast %cst_62 : f32 to vector<16x128xf32>
    %145 = arith.select %18, %143, %144 : vector<16x128xi1>, vector<16x128xf32>
    %c1_i32_63 = arith.constant 1 : i32
    %146 = tpu.dynamic_rotate %142 by %c1_i32_63 dim 0 : vector<16x128xf32>, i32 -> vector<16x128xf32>
    %cst_64 = arith.constant -3.40282347E+38 : f32
    %147 = vector.broadcast %cst_64 : f32 to vector<16x128xf32>
    %148 = arith.select %20, %146, %147 : vector<16x128xi1>, vector<16x128xf32>
    %149 = arith.maximumf %145, %148 : vector<16x128xf32>
    %150 = arith.maximumf %142, %149 : vector<16x128xf32>
    %c127_i32_65 = arith.constant 127 : i32
    %151 = tpu.dynamic_rotate %150 by %c127_i32_65 dim 1 : vector<16x128xf32>, i32 -> vector<16x128xf32>
    %cst_66 = arith.constant -3.40282347E+38 : f32
    %152 = vector.broadcast %cst_66 : f32 to vector<16x128xf32>
    %153 = arith.select %22, %151, %152 : vector<16x128xi1>, vector<16x128xf32>
    %c1_i32_67 = arith.constant 1 : i32
    %154 = tpu.dynamic_rotate %150 by %c1_i32_67 dim 1 : vector<16x128xf32>, i32 -> vector<16x128xf32>
    %cst_68 = arith.constant -3.40282347E+38 : f32
    %155 = vector.broadcast %cst_68 : f32 to vector<16x128xf32>
    %156 = arith.select %24, %154, %155 : vector<16x128xi1>, vector<16x128xf32>
    %157 = arith.maximumf %153, %156 : vector<16x128xf32>
    %158 = arith.maximumf %150, %157 : vector<16x128xf32>
    %159 = arith.subf %108, %158 : vector<16x128xf32>
    %160 = arith.addf %126, %159 : vector<16x128xf32>
    %c3_i32 = arith.constant 3 : i32
    %c15_i32_69 = arith.constant 15 : i32
    %161 = tpu.dynamic_rotate %142 by %c15_i32_69 dim 0 : vector<16x128xf32>, i32 -> vector<16x128xf32>
    %cst_70 = arith.constant 3.40282347E+38 : f32
    %162 = vector.broadcast %cst_70 : f32 to vector<16x128xf32>
    %163 = arith.select %18, %161, %162 : vector<16x128xi1>, vector<16x128xf32>
    %c1_i32_71 = arith.constant 1 : i32
    %164 = tpu.dynamic_rotate %142 by %c1_i32_71 dim 0 : vector<16x128xf32>, i32 -> vector<16x128xf32>
    %cst_72 = arith.constant 3.40282347E+38 : f32
    %165 = vector.broadcast %cst_72 : f32 to vector<16x128xf32>
    %166 = arith.select %20, %164, %165 : vector<16x128xi1>, vector<16x128xf32>
    %167 = arith.minimumf %163, %166 : vector<16x128xf32>
    %168 = arith.minimumf %142, %167 : vector<16x128xf32>
    %c127_i32_73 = arith.constant 127 : i32
    %169 = tpu.dynamic_rotate %168 by %c127_i32_73 dim 1 : vector<16x128xf32>, i32 -> vector<16x128xf32>
    %cst_74 = arith.constant 3.40282347E+38 : f32
    %170 = vector.broadcast %cst_74 : f32 to vector<16x128xf32>
    %171 = arith.select %22, %169, %170 : vector<16x128xi1>, vector<16x128xf32>
    %c1_i32_75 = arith.constant 1 : i32
    %172 = tpu.dynamic_rotate %168 by %c1_i32_75 dim 1 : vector<16x128xf32>, i32 -> vector<16x128xf32>
    %cst_76 = arith.constant 3.40282347E+38 : f32
    %173 = vector.broadcast %cst_76 : f32 to vector<16x128xf32>
    %174 = arith.select %24, %172, %173 : vector<16x128xi1>, vector<16x128xf32>
    %175 = arith.minimumf %171, %174 : vector<16x128xf32>
    %176 = arith.minimumf %168, %175 : vector<16x128xf32>
    %c15_i32_77 = arith.constant 15 : i32
    %177 = tpu.dynamic_rotate %176 by %c15_i32_77 dim 0 : vector<16x128xf32>, i32 -> vector<16x128xf32>
    %cst_78 = arith.constant -3.40282347E+38 : f32
    %178 = vector.broadcast %cst_78 : f32 to vector<16x128xf32>
    %179 = arith.select %18, %177, %178 : vector<16x128xi1>, vector<16x128xf32>
    %c1_i32_79 = arith.constant 1 : i32
    %180 = tpu.dynamic_rotate %176 by %c1_i32_79 dim 0 : vector<16x128xf32>, i32 -> vector<16x128xf32>
    %cst_80 = arith.constant -3.40282347E+38 : f32
    %181 = vector.broadcast %cst_80 : f32 to vector<16x128xf32>
    %182 = arith.select %20, %180, %181 : vector<16x128xi1>, vector<16x128xf32>
    %183 = arith.maximumf %179, %182 : vector<16x128xf32>
    %184 = arith.maximumf %176, %183 : vector<16x128xf32>
    %c127_i32_81 = arith.constant 127 : i32
    %185 = tpu.dynamic_rotate %184 by %c127_i32_81 dim 1 : vector<16x128xf32>, i32 -> vector<16x128xf32>
    %cst_82 = arith.constant -3.40282347E+38 : f32
    %186 = vector.broadcast %cst_82 : f32 to vector<16x128xf32>
    %187 = arith.select %22, %185, %186 : vector<16x128xi1>, vector<16x128xf32>
    %c1_i32_83 = arith.constant 1 : i32
    %188 = tpu.dynamic_rotate %184 by %c1_i32_83 dim 1 : vector<16x128xf32>, i32 -> vector<16x128xf32>
    %cst_84 = arith.constant -3.40282347E+38 : f32
    %189 = vector.broadcast %cst_84 : f32 to vector<16x128xf32>
    %190 = arith.select %24, %188, %189 : vector<16x128xi1>, vector<16x128xf32>
    %191 = arith.maximumf %187, %190 : vector<16x128xf32>
    %192 = arith.maximumf %184, %191 : vector<16x128xf32>
    %193 = arith.subf %142, %192 : vector<16x128xf32>
    %194 = arith.addf %160, %193 : vector<16x128xf32>
    %c4_i32 = arith.constant 4 : i32
    %c15_i32_85 = arith.constant 15 : i32
    %195 = tpu.dynamic_rotate %176 by %c15_i32_85 dim 0 : vector<16x128xf32>, i32 -> vector<16x128xf32>
    %cst_86 = arith.constant 3.40282347E+38 : f32
    %196 = vector.broadcast %cst_86 : f32 to vector<16x128xf32>
    %197 = arith.select %18, %195, %196 : vector<16x128xi1>, vector<16x128xf32>
    %c1_i32_87 = arith.constant 1 : i32
    %198 = tpu.dynamic_rotate %176 by %c1_i32_87 dim 0 : vector<16x128xf32>, i32 -> vector<16x128xf32>
    %cst_88 = arith.constant 3.40282347E+38 : f32
    %199 = vector.broadcast %cst_88 : f32 to vector<16x128xf32>
    %200 = arith.select %20, %198, %199 : vector<16x128xi1>, vector<16x128xf32>
    %201 = arith.minimumf %197, %200 : vector<16x128xf32>
    %202 = arith.minimumf %176, %201 : vector<16x128xf32>
    %c127_i32_89 = arith.constant 127 : i32
    %203 = tpu.dynamic_rotate %202 by %c127_i32_89 dim 1 : vector<16x128xf32>, i32 -> vector<16x128xf32>
    %cst_90 = arith.constant 3.40282347E+38 : f32
    %204 = vector.broadcast %cst_90 : f32 to vector<16x128xf32>
    %205 = arith.select %22, %203, %204 : vector<16x128xi1>, vector<16x128xf32>
    %c1_i32_91 = arith.constant 1 : i32
    %206 = tpu.dynamic_rotate %202 by %c1_i32_91 dim 1 : vector<16x128xf32>, i32 -> vector<16x128xf32>
    %cst_92 = arith.constant 3.40282347E+38 : f32
    %207 = vector.broadcast %cst_92 : f32 to vector<16x128xf32>
    %208 = arith.select %24, %206, %207 : vector<16x128xi1>, vector<16x128xf32>
    %209 = arith.minimumf %205, %208 : vector<16x128xf32>
    %210 = arith.minimumf %202, %209 : vector<16x128xf32>
    %c15_i32_93 = arith.constant 15 : i32
    %211 = tpu.dynamic_rotate %210 by %c15_i32_93 dim 0 : vector<16x128xf32>, i32 -> vector<16x128xf32>
    %cst_94 = arith.constant -3.40282347E+38 : f32
    %212 = vector.broadcast %cst_94 : f32 to vector<16x128xf32>
    %213 = arith.select %18, %211, %212 : vector<16x128xi1>, vector<16x128xf32>
    %c1_i32_95 = arith.constant 1 : i32
    %214 = tpu.dynamic_rotate %210 by %c1_i32_95 dim 0 : vector<16x128xf32>, i32 -> vector<16x128xf32>
    %cst_96 = arith.constant -3.40282347E+38 : f32
    %215 = vector.broadcast %cst_96 : f32 to vector<16x128xf32>
    %216 = arith.select %20, %214, %215 : vector<16x128xi1>, vector<16x128xf32>
    %217 = arith.maximumf %213, %216 : vector<16x128xf32>
    %218 = arith.maximumf %210, %217 : vector<16x128xf32>
    %c127_i32_97 = arith.constant 127 : i32
    %219 = tpu.dynamic_rotate %218 by %c127_i32_97 dim 1 : vector<16x128xf32>, i32 -> vector<16x128xf32>
    %cst_98 = arith.constant -3.40282347E+38 : f32
    %220 = vector.broadcast %cst_98 : f32 to vector<16x128xf32>
    %221 = arith.select %22, %219, %220 : vector<16x128xi1>, vector<16x128xf32>
    %c1_i32_99 = arith.constant 1 : i32
    %222 = tpu.dynamic_rotate %218 by %c1_i32_99 dim 1 : vector<16x128xf32>, i32 -> vector<16x128xf32>
    %cst_100 = arith.constant -3.40282347E+38 : f32
    %223 = vector.broadcast %cst_100 : f32 to vector<16x128xf32>
    %224 = arith.select %24, %222, %223 : vector<16x128xi1>, vector<16x128xf32>
    %225 = arith.maximumf %221, %224 : vector<16x128xf32>
    %226 = arith.maximumf %218, %225 : vector<16x128xf32>
    %227 = arith.subf %176, %226 : vector<16x128xf32>
    %228 = arith.addf %194, %227 : vector<16x128xf32>
    %c5_i32 = arith.constant 5 : i32
    %c15_i32_101 = arith.constant 15 : i32
    %229 = tpu.dynamic_rotate %210 by %c15_i32_101 dim 0 : vector<16x128xf32>, i32 -> vector<16x128xf32>
    %cst_102 = arith.constant 3.40282347E+38 : f32
    %230 = vector.broadcast %cst_102 : f32 to vector<16x128xf32>
    %231 = arith.select %18, %229, %230 : vector<16x128xi1>, vector<16x128xf32>
    %c1_i32_103 = arith.constant 1 : i32
    %232 = tpu.dynamic_rotate %210 by %c1_i32_103 dim 0 : vector<16x128xf32>, i32 -> vector<16x128xf32>
    %cst_104 = arith.constant 3.40282347E+38 : f32
    %233 = vector.broadcast %cst_104 : f32 to vector<16x128xf32>
    %234 = arith.select %20, %232, %233 : vector<16x128xi1>, vector<16x128xf32>
    %235 = arith.minimumf %231, %234 : vector<16x128xf32>
    %236 = arith.minimumf %210, %235 : vector<16x128xf32>
    %c127_i32_105 = arith.constant 127 : i32
    %237 = tpu.dynamic_rotate %236 by %c127_i32_105 dim 1 : vector<16x128xf32>, i32 -> vector<16x128xf32>
    %cst_106 = arith.constant 3.40282347E+38 : f32
    %238 = vector.broadcast %cst_106 : f32 to vector<16x128xf32>
    %239 = arith.select %22, %237, %238 : vector<16x128xi1>, vector<16x128xf32>
    %c1_i32_107 = arith.constant 1 : i32
    %240 = tpu.dynamic_rotate %236 by %c1_i32_107 dim 1 : vector<16x128xf32>, i32 -> vector<16x128xf32>
    %cst_108 = arith.constant 3.40282347E+38 : f32
    %241 = vector.broadcast %cst_108 : f32 to vector<16x128xf32>
    %242 = arith.select %24, %240, %241 : vector<16x128xi1>, vector<16x128xf32>
    %243 = arith.minimumf %239, %242 : vector<16x128xf32>
    %244 = arith.minimumf %236, %243 : vector<16x128xf32>
    %c15_i32_109 = arith.constant 15 : i32
    %245 = tpu.dynamic_rotate %244 by %c15_i32_109 dim 0 : vector<16x128xf32>, i32 -> vector<16x128xf32>
    %cst_110 = arith.constant -3.40282347E+38 : f32
    %246 = vector.broadcast %cst_110 : f32 to vector<16x128xf32>
    %247 = arith.select %18, %245, %246 : vector<16x128xi1>, vector<16x128xf32>
    %c1_i32_111 = arith.constant 1 : i32
    %248 = tpu.dynamic_rotate %244 by %c1_i32_111 dim 0 : vector<16x128xf32>, i32 -> vector<16x128xf32>
    %cst_112 = arith.constant -3.40282347E+38 : f32
    %249 = vector.broadcast %cst_112 : f32 to vector<16x128xf32>
    %250 = arith.select %20, %248, %249 : vector<16x128xi1>, vector<16x128xf32>
    %251 = arith.maximumf %247, %250 : vector<16x128xf32>
    %252 = arith.maximumf %244, %251 : vector<16x128xf32>
    %c127_i32_113 = arith.constant 127 : i32
    %253 = tpu.dynamic_rotate %252 by %c127_i32_113 dim 1 : vector<16x128xf32>, i32 -> vector<16x128xf32>
    %cst_114 = arith.constant -3.40282347E+38 : f32
    %254 = vector.broadcast %cst_114 : f32 to vector<16x128xf32>
    %255 = arith.select %22, %253, %254 : vector<16x128xi1>, vector<16x128xf32>
    %c1_i32_115 = arith.constant 1 : i32
    %256 = tpu.dynamic_rotate %252 by %c1_i32_115 dim 1 : vector<16x128xf32>, i32 -> vector<16x128xf32>
    %cst_116 = arith.constant -3.40282347E+38 : f32
    %257 = vector.broadcast %cst_116 : f32 to vector<16x128xf32>
    %258 = arith.select %24, %256, %257 : vector<16x128xi1>, vector<16x128xf32>
    %259 = arith.maximumf %255, %258 : vector<16x128xf32>
    %260 = arith.maximumf %252, %259 : vector<16x128xf32>
    %261 = arith.subf %210, %260 : vector<16x128xf32>
    %262 = arith.addf %228, %261 : vector<16x128xf32>
    %c6_i32 = arith.constant 6 : i32
    %c15_i32_117 = arith.constant 15 : i32
    %263 = tpu.dynamic_rotate %244 by %c15_i32_117 dim 0 : vector<16x128xf32>, i32 -> vector<16x128xf32>
    %cst_118 = arith.constant 3.40282347E+38 : f32
    %264 = vector.broadcast %cst_118 : f32 to vector<16x128xf32>
    %265 = arith.select %18, %263, %264 : vector<16x128xi1>, vector<16x128xf32>
    %c1_i32_119 = arith.constant 1 : i32
    %266 = tpu.dynamic_rotate %244 by %c1_i32_119 dim 0 : vector<16x128xf32>, i32 -> vector<16x128xf32>
    %cst_120 = arith.constant 3.40282347E+38 : f32
    %267 = vector.broadcast %cst_120 : f32 to vector<16x128xf32>
    %268 = arith.select %20, %266, %267 : vector<16x128xi1>, vector<16x128xf32>
    %269 = arith.minimumf %265, %268 : vector<16x128xf32>
    %270 = arith.minimumf %244, %269 : vector<16x128xf32>
    %c127_i32_121 = arith.constant 127 : i32
    %271 = tpu.dynamic_rotate %270 by %c127_i32_121 dim 1 : vector<16x128xf32>, i32 -> vector<16x128xf32>
    %cst_122 = arith.constant 3.40282347E+38 : f32
    %272 = vector.broadcast %cst_122 : f32 to vector<16x128xf32>
    %273 = arith.select %22, %271, %272 : vector<16x128xi1>, vector<16x128xf32>
    %c1_i32_123 = arith.constant 1 : i32
    %274 = tpu.dynamic_rotate %270 by %c1_i32_123 dim 1 : vector<16x128xf32>, i32 -> vector<16x128xf32>
    %cst_124 = arith.constant 3.40282347E+38 : f32
    %275 = vector.broadcast %cst_124 : f32 to vector<16x128xf32>
    %276 = arith.select %24, %274, %275 : vector<16x128xi1>, vector<16x128xf32>
    %277 = arith.minimumf %273, %276 : vector<16x128xf32>
    %278 = arith.minimumf %270, %277 : vector<16x128xf32>
    %c15_i32_125 = arith.constant 15 : i32
    %279 = tpu.dynamic_rotate %278 by %c15_i32_125 dim 0 : vector<16x128xf32>, i32 -> vector<16x128xf32>
    %cst_126 = arith.constant -3.40282347E+38 : f32
    %280 = vector.broadcast %cst_126 : f32 to vector<16x128xf32>
    %281 = arith.select %18, %279, %280 : vector<16x128xi1>, vector<16x128xf32>
    %c1_i32_127 = arith.constant 1 : i32
    %282 = tpu.dynamic_rotate %278 by %c1_i32_127 dim 0 : vector<16x128xf32>, i32 -> vector<16x128xf32>
    %cst_128 = arith.constant -3.40282347E+38 : f32
    %283 = vector.broadcast %cst_128 : f32 to vector<16x128xf32>
    %284 = arith.select %20, %282, %283 : vector<16x128xi1>, vector<16x128xf32>
    %285 = arith.maximumf %281, %284 : vector<16x128xf32>
    %286 = arith.maximumf %278, %285 : vector<16x128xf32>
    %c127_i32_129 = arith.constant 127 : i32
    %287 = tpu.dynamic_rotate %286 by %c127_i32_129 dim 1 : vector<16x128xf32>, i32 -> vector<16x128xf32>
    %cst_130 = arith.constant -3.40282347E+38 : f32
    %288 = vector.broadcast %cst_130 : f32 to vector<16x128xf32>
    %289 = arith.select %22, %287, %288 : vector<16x128xi1>, vector<16x128xf32>
    %c1_i32_131 = arith.constant 1 : i32
    %290 = tpu.dynamic_rotate %286 by %c1_i32_131 dim 1 : vector<16x128xf32>, i32 -> vector<16x128xf32>
    %cst_132 = arith.constant -3.40282347E+38 : f32
    %291 = vector.broadcast %cst_132 : f32 to vector<16x128xf32>
    %292 = arith.select %24, %290, %291 : vector<16x128xi1>, vector<16x128xf32>
    %293 = arith.maximumf %289, %292 : vector<16x128xf32>
    %294 = arith.maximumf %286, %293 : vector<16x128xf32>
    %295 = arith.subf %244, %294 : vector<16x128xf32>
    %296 = arith.addf %262, %295 : vector<16x128xf32>
    %c7_i32 = arith.constant 7 : i32
    %c15_i32_133 = arith.constant 15 : i32
    %297 = tpu.dynamic_rotate %278 by %c15_i32_133 dim 0 : vector<16x128xf32>, i32 -> vector<16x128xf32>
    %cst_134 = arith.constant 3.40282347E+38 : f32
    %298 = vector.broadcast %cst_134 : f32 to vector<16x128xf32>
    %299 = arith.select %18, %297, %298 : vector<16x128xi1>, vector<16x128xf32>
    %c1_i32_135 = arith.constant 1 : i32
    %300 = tpu.dynamic_rotate %278 by %c1_i32_135 dim 0 : vector<16x128xf32>, i32 -> vector<16x128xf32>
    %cst_136 = arith.constant 3.40282347E+38 : f32
    %301 = vector.broadcast %cst_136 : f32 to vector<16x128xf32>
    %302 = arith.select %20, %300, %301 : vector<16x128xi1>, vector<16x128xf32>
    %303 = arith.minimumf %299, %302 : vector<16x128xf32>
    %304 = arith.minimumf %278, %303 : vector<16x128xf32>
    %c127_i32_137 = arith.constant 127 : i32
    %305 = tpu.dynamic_rotate %304 by %c127_i32_137 dim 1 : vector<16x128xf32>, i32 -> vector<16x128xf32>
    %cst_138 = arith.constant 3.40282347E+38 : f32
    %306 = vector.broadcast %cst_138 : f32 to vector<16x128xf32>
    %307 = arith.select %22, %305, %306 : vector<16x128xi1>, vector<16x128xf32>
    %c1_i32_139 = arith.constant 1 : i32
    %308 = tpu.dynamic_rotate %304 by %c1_i32_139 dim 1 : vector<16x128xf32>, i32 -> vector<16x128xf32>
    %cst_140 = arith.constant 3.40282347E+38 : f32
    %309 = vector.broadcast %cst_140 : f32 to vector<16x128xf32>
    %310 = arith.select %24, %308, %309 : vector<16x128xi1>, vector<16x128xf32>
    %311 = arith.minimumf %307, %310 : vector<16x128xf32>
    %312 = arith.minimumf %304, %311 : vector<16x128xf32>
    %c15_i32_141 = arith.constant 15 : i32
    %313 = tpu.dynamic_rotate %312 by %c15_i32_141 dim 0 : vector<16x128xf32>, i32 -> vector<16x128xf32>
    %cst_142 = arith.constant -3.40282347E+38 : f32
    %314 = vector.broadcast %cst_142 : f32 to vector<16x128xf32>
    %315 = arith.select %18, %313, %314 : vector<16x128xi1>, vector<16x128xf32>
    %c1_i32_143 = arith.constant 1 : i32
    %316 = tpu.dynamic_rotate %312 by %c1_i32_143 dim 0 : vector<16x128xf32>, i32 -> vector<16x128xf32>
    %cst_144 = arith.constant -3.40282347E+38 : f32
    %317 = vector.broadcast %cst_144 : f32 to vector<16x128xf32>
    %318 = arith.select %20, %316, %317 : vector<16x128xi1>, vector<16x128xf32>
    %319 = arith.maximumf %315, %318 : vector<16x128xf32>
    %320 = arith.maximumf %312, %319 : vector<16x128xf32>
    %c127_i32_145 = arith.constant 127 : i32
    %321 = tpu.dynamic_rotate %320 by %c127_i32_145 dim 1 : vector<16x128xf32>, i32 -> vector<16x128xf32>
    %cst_146 = arith.constant -3.40282347E+38 : f32
    %322 = vector.broadcast %cst_146 : f32 to vector<16x128xf32>
    %323 = arith.select %22, %321, %322 : vector<16x128xi1>, vector<16x128xf32>
    %c1_i32_147 = arith.constant 1 : i32
    %324 = tpu.dynamic_rotate %320 by %c1_i32_147 dim 1 : vector<16x128xf32>, i32 -> vector<16x128xf32>
    %cst_148 = arith.constant -3.40282347E+38 : f32
    %325 = vector.broadcast %cst_148 : f32 to vector<16x128xf32>
    %326 = arith.select %24, %324, %325 : vector<16x128xi1>, vector<16x128xf32>
    %327 = arith.maximumf %323, %326 : vector<16x128xf32>
    %328 = arith.maximumf %320, %327 : vector<16x128xf32>
    %329 = arith.subf %278, %328 : vector<16x128xf32>
    %330 = arith.addf %296, %329 : vector<16x128xf32>
    %c8_i32 = arith.constant 8 : i32
    %c15_i32_149 = arith.constant 15 : i32
    %331 = tpu.dynamic_rotate %312 by %c15_i32_149 dim 0 : vector<16x128xf32>, i32 -> vector<16x128xf32>
    %cst_150 = arith.constant 3.40282347E+38 : f32
    %332 = vector.broadcast %cst_150 : f32 to vector<16x128xf32>
    %333 = arith.select %18, %331, %332 : vector<16x128xi1>, vector<16x128xf32>
    %c1_i32_151 = arith.constant 1 : i32
    %334 = tpu.dynamic_rotate %312 by %c1_i32_151 dim 0 : vector<16x128xf32>, i32 -> vector<16x128xf32>
    %cst_152 = arith.constant 3.40282347E+38 : f32
    %335 = vector.broadcast %cst_152 : f32 to vector<16x128xf32>
    %336 = arith.select %20, %334, %335 : vector<16x128xi1>, vector<16x128xf32>
    %337 = arith.minimumf %333, %336 : vector<16x128xf32>
    %338 = arith.minimumf %312, %337 : vector<16x128xf32>
    %c127_i32_153 = arith.constant 127 : i32
    %339 = tpu.dynamic_rotate %338 by %c127_i32_153 dim 1 : vector<16x128xf32>, i32 -> vector<16x128xf32>
    %cst_154 = arith.constant 3.40282347E+38 : f32
    %340 = vector.broadcast %cst_154 : f32 to vector<16x128xf32>
    %341 = arith.select %22, %339, %340 : vector<16x128xi1>, vector<16x128xf32>
    %c1_i32_155 = arith.constant 1 : i32
    %342 = tpu.dynamic_rotate %338 by %c1_i32_155 dim 1 : vector<16x128xf32>, i32 -> vector<16x128xf32>
    %cst_156 = arith.constant 3.40282347E+38 : f32
    %343 = vector.broadcast %cst_156 : f32 to vector<16x128xf32>
    %344 = arith.select %24, %342, %343 : vector<16x128xi1>, vector<16x128xf32>
    %345 = arith.minimumf %341, %344 : vector<16x128xf32>
    %346 = arith.minimumf %338, %345 : vector<16x128xf32>
    %c15_i32_157 = arith.constant 15 : i32
    %347 = tpu.dynamic_rotate %346 by %c15_i32_157 dim 0 : vector<16x128xf32>, i32 -> vector<16x128xf32>
    %cst_158 = arith.constant -3.40282347E+38 : f32
    %348 = vector.broadcast %cst_158 : f32 to vector<16x128xf32>
    %349 = arith.select %18, %347, %348 : vector<16x128xi1>, vector<16x128xf32>
    %c1_i32_159 = arith.constant 1 : i32
    %350 = tpu.dynamic_rotate %346 by %c1_i32_159 dim 0 : vector<16x128xf32>, i32 -> vector<16x128xf32>
    %cst_160 = arith.constant -3.40282347E+38 : f32
    %351 = vector.broadcast %cst_160 : f32 to vector<16x128xf32>
    %352 = arith.select %20, %350, %351 : vector<16x128xi1>, vector<16x128xf32>
    %353 = arith.maximumf %349, %352 : vector<16x128xf32>
    %354 = arith.maximumf %346, %353 : vector<16x128xf32>
    %c127_i32_161 = arith.constant 127 : i32
    %355 = tpu.dynamic_rotate %354 by %c127_i32_161 dim 1 : vector<16x128xf32>, i32 -> vector<16x128xf32>
    %cst_162 = arith.constant -3.40282347E+38 : f32
    %356 = vector.broadcast %cst_162 : f32 to vector<16x128xf32>
    %357 = arith.select %22, %355, %356 : vector<16x128xi1>, vector<16x128xf32>
    %c1_i32_163 = arith.constant 1 : i32
    %358 = tpu.dynamic_rotate %354 by %c1_i32_163 dim 1 : vector<16x128xf32>, i32 -> vector<16x128xf32>
    %cst_164 = arith.constant -3.40282347E+38 : f32
    %359 = vector.broadcast %cst_164 : f32 to vector<16x128xf32>
    %360 = arith.select %24, %358, %359 : vector<16x128xi1>, vector<16x128xf32>
    %361 = arith.maximumf %357, %360 : vector<16x128xf32>
    %362 = arith.maximumf %354, %361 : vector<16x128xf32>
    %363 = arith.subf %312, %362 : vector<16x128xf32>
    %364 = arith.addf %330, %363 : vector<16x128xf32>
    %c9_i32 = arith.constant 9 : i32
    %c15_i32_165 = arith.constant 15 : i32
    %365 = tpu.dynamic_rotate %346 by %c15_i32_165 dim 0 : vector<16x128xf32>, i32 -> vector<16x128xf32>
    %cst_166 = arith.constant 3.40282347E+38 : f32
    %366 = vector.broadcast %cst_166 : f32 to vector<16x128xf32>
    %367 = arith.select %18, %365, %366 : vector<16x128xi1>, vector<16x128xf32>
    %c1_i32_167 = arith.constant 1 : i32
    %368 = tpu.dynamic_rotate %346 by %c1_i32_167 dim 0 : vector<16x128xf32>, i32 -> vector<16x128xf32>
    %cst_168 = arith.constant 3.40282347E+38 : f32
    %369 = vector.broadcast %cst_168 : f32 to vector<16x128xf32>
    %370 = arith.select %20, %368, %369 : vector<16x128xi1>, vector<16x128xf32>
    %371 = arith.minimumf %367, %370 : vector<16x128xf32>
    %372 = arith.minimumf %346, %371 : vector<16x128xf32>
    %c127_i32_169 = arith.constant 127 : i32
    %373 = tpu.dynamic_rotate %372 by %c127_i32_169 dim 1 : vector<16x128xf32>, i32 -> vector<16x128xf32>
    %cst_170 = arith.constant 3.40282347E+38 : f32
    %374 = vector.broadcast %cst_170 : f32 to vector<16x128xf32>
    %375 = arith.select %22, %373, %374 : vector<16x128xi1>, vector<16x128xf32>
    %c1_i32_171 = arith.constant 1 : i32
    %376 = tpu.dynamic_rotate %372 by %c1_i32_171 dim 1 : vector<16x128xf32>, i32 -> vector<16x128xf32>
    %cst_172 = arith.constant 3.40282347E+38 : f32
    %377 = vector.broadcast %cst_172 : f32 to vector<16x128xf32>
    %378 = arith.select %24, %376, %377 : vector<16x128xi1>, vector<16x128xf32>
    %379 = arith.minimumf %375, %378 : vector<16x128xf32>
    %380 = arith.minimumf %372, %379 : vector<16x128xf32>
    %c15_i32_173 = arith.constant 15 : i32
    %381 = tpu.dynamic_rotate %380 by %c15_i32_173 dim 0 : vector<16x128xf32>, i32 -> vector<16x128xf32>
    %cst_174 = arith.constant -3.40282347E+38 : f32
    %382 = vector.broadcast %cst_174 : f32 to vector<16x128xf32>
    %383 = arith.select %18, %381, %382 : vector<16x128xi1>, vector<16x128xf32>
    %c1_i32_175 = arith.constant 1 : i32
    %384 = tpu.dynamic_rotate %380 by %c1_i32_175 dim 0 : vector<16x128xf32>, i32 -> vector<16x128xf32>
    %cst_176 = arith.constant -3.40282347E+38 : f32
    %385 = vector.broadcast %cst_176 : f32 to vector<16x128xf32>
    %386 = arith.select %20, %384, %385 : vector<16x128xi1>, vector<16x128xf32>
    %387 = arith.maximumf %383, %386 : vector<16x128xf32>
    %388 = arith.maximumf %380, %387 : vector<16x128xf32>
    %c127_i32_177 = arith.constant 127 : i32
    %389 = tpu.dynamic_rotate %388 by %c127_i32_177 dim 1 : vector<16x128xf32>, i32 -> vector<16x128xf32>
    %cst_178 = arith.constant -3.40282347E+38 : f32
    %390 = vector.broadcast %cst_178 : f32 to vector<16x128xf32>
    %391 = arith.select %22, %389, %390 : vector<16x128xi1>, vector<16x128xf32>
    %c1_i32_179 = arith.constant 1 : i32
    %392 = tpu.dynamic_rotate %388 by %c1_i32_179 dim 1 : vector<16x128xf32>, i32 -> vector<16x128xf32>
    %cst_180 = arith.constant -3.40282347E+38 : f32
    %393 = vector.broadcast %cst_180 : f32 to vector<16x128xf32>
    %394 = arith.select %24, %392, %393 : vector<16x128xi1>, vector<16x128xf32>
    %395 = arith.maximumf %391, %394 : vector<16x128xf32>
    %396 = arith.maximumf %388, %395 : vector<16x128xf32>
    %397 = arith.subf %346, %396 : vector<16x128xf32>
    %398 = arith.addf %364, %397 : vector<16x128xf32>
    %c0_181 = arith.constant 0 : index
    %c0_182 = arith.constant 0 : index
    %399 = vector.load %arg2[%c0_181, %c0_182] : memref<16x128xf32, #tpu.memory_space<vmem>>, vector<16x128xf32>
    tpu.vector_store %arg2[%c0_181, %c0_182], %398 {strides = array<i32>} : memref<16x128xf32, #tpu.memory_space<vmem>>, vector<16x128xf32>,
    return
  }
  func.func @transform_0(%arg0: i32) -> (i32, i32) {
    %c0_i32 = arith.constant 0 : i32
    %c0_i32_0 = arith.constant 0 : i32
    return %arg0, %c0_i32 : i32, i32
  }
  func.func @transform_1(%arg0: i32) -> (i32, i32) {
    %c0_i32 = arith.constant 0 : i32
    %c0_i32_0 = arith.constant 0 : i32
    return %arg0, %c0_i32 : i32, i32
  }
}

</mosaic_0001>

<llo_original>
// kernel: tpu_custom_call.1
$region0: #{tpu_custom_call.1}
  #allocation0 [shape = 'u32[]', space=smem, size = 0x4, offset = 0x4, fixed_abs, tag = 'smem constant byte address 0x4 - core index']
  #allocation1 [shape = 'u32[144,128]{1,0:T(1,128)}', space=vmem, size = 0x12000, scoped, tag = 'internal scratch']
  %s0 = inlined_call_operand.hbm [shape: f32[16,128], index: 0, kind: input, shape index: {}]
  %s1 = inlined_call_operand.hbm [shape: f32[16,128], index: 1, kind: output, shape index: {}]
  %s2 = sld [smem:[#allocation0]]
  $region18: #{tpu_custom_call.1} parent=0
    _
  %s4 = ssub.s32 1, %s2
  %s5 = scalar_select 0, %s4, %s2
  $region1: #{tpu_custom_call.1} parent=0
    #allocation2 [shape = 'u8[8192]{0}', space=vmem, size = 0x2000, scoped, tag = 'input window, operand 0, single buffered']
    #allocation3 [shape = 's32[1]{0}', space=sflag, size = 0x4, scoped, tag = 'scoped memory for tpu_custom_call.1']
    #allocation4 [shape = 's32[1]{0}', space=sflag, size = 0x4, scoped, tag = 'scoped memory for tpu_custom_call.1']
    #allocation5 [shape = 'u8[8192]{0}', space=vmem, size = 0x2000, scoped, tag = 'output window, operand 0, single buffered']
    %6 = vsyncpa [#allocation3], 0
    %7 = vsyncpa [#allocation4], 0
    // Predicated region
    $region2: #{tpu_custom_call.1} parent=1 // pred_check
      _
    $region3: #{tpu_custom_call.1} parent=1 // pred_check_branch
      %9 = sbr.rel (0) target = $region5
    $region4: #{tpu_custom_call.1} parent=1 // pred_region
      %s11 = ssub.s32 256, 256
      %12 = vsyncadd [#allocation3], %s11
      %s13 = sshll.u32 [#allocation2], 4
      %s14 = int_to_ptr.vmem [resolvable:$true] %s13
      %19 = dma.hbm_to_vmem [thread:$0]  %s0, 256, %s14, [#allocation3], 128, 128, 8
    $region5: #{tpu_custom_call.1} parent=1 // pred_fallthru
      _
    // Predicated region
    $region6: #{tpu_custom_call.1} parent=1 // pred_check
      _
    $region7: #{tpu_custom_call.1} parent=1 // pred_check_branch
      %21 = sbr.rel (0) target = $region9
    $region8: #{tpu_custom_call.1} parent=1 // pred_region
      %22 = dma.done [#allocation3], 256
    $region9: #{tpu_custom_call.1} parent=1 // pred_fallthru
      _
    %v23 = vlaneseq
    %v24 = vshrl.u32 %v23, 7
    %v25 = vadd.s32 %v24, 8
    %v26 = vlaneseq
    %v27 = vand.u32 %v26, 127
    %vm28 = vcmp.ge.s32.totalorder %v27, 64
    %v29 = vsub.s32 %v27, 64
    %v30 = vsel %vm28, %v29, %v27
    %vm31 = vcmp.ge.s32.totalorder %v30, 32
    %v32 = vsub.s32 %v30, 32
    %v33 = vsel %vm31, %v32, %v30
    %vm34 = vcmp.ge.s32.totalorder %v33, 16
    %v35 = vsub.s32 %v33, 16
    %v36 = vsel %vm34, %v35, %v33
    %vm37 = vcmp.lt.s32.totalorder %v24, 15
    %vm38 = vcmp.lt.s32.totalorder %v25, 15
    %vm39 = vcmp.ge.s32.totalorder %v24, 1
    %vm40 = vcmp.ge.s32.totalorder %v25, 1
    %vm41 = vcmp.lt.s32.totalorder %v36, 15
    %vm42 = vcmp.ge.s32.totalorder %v36, 1
    %v43 = vld [vmem:[#allocation2] sm:$0xff]
    %v44 = vld [vmem:[#allocation2 + $0x8] sm:$0xff]
    %v45 = vrot.slane %v43, 1
    %v46 = vrot.slane %v44, 1
    %vm47 = vcmp.lt.s32.totalorder %v24, 7
    %v48 = vsel %vm47, %v45, %v46
    %v49 = vsel %vm47, %v46, %v45
    %v50 = vsel %vm37, %v48, 3.4028235e+38
    %v51 = vsel %vm38, %v49, 3.4028235e+38
    %v52 = vrot.slane %v43, 7
    %v53 = vrot.slane %v44, 7
    %vm54 = vcmp.lt.s32.totalorder %v24, 1
    %v55 = vsel %vm54, %v52, %v53
    %v56 = vsel %vm54, %v53, %v52
    %v57 = vsel %vm39, %v56, 3.4028235e+38
    %v58 = vsel %vm40, %v55, 3.4028235e+38
    %v59 = vmin.f32 %v50, %v57
    %v60 = vmin.f32 %v51, %v58
    %v61 = vmin.f32 %v43, %v59
    %v62 = vmin.f32 %v44, %v60
    %63 = vrot.lane.b32.xlu0 %v61, 127
    %v64 = vpop.permute.xlu0 %63
    %65 = vrot.lane.b32.xlu0 %v62, 127
    %v66 = vpop.permute.xlu0 %65
    %v67 = vsel %vm41, %v64, 3.4028235e+38
    %v68 = vsel %vm41, %v66, 3.4028235e+38
    %69 = vrot.lane.b32.xlu0 %v61, 1
    %v70 = vpop.permute.xlu0 %69
    %71 = vrot.lane.b32.xlu0 %v62, 1
    %v72 = vpop.permute.xlu0 %71
    %v73 = vsel %vm42, %v70, 3.4028235e+38
    %v74 = vsel %vm42, %v72, 3.4028235e+38
    %v75 = vmin.f32 %v67, %v73
    %v76 = vmin.f32 %v68, %v74
    %v77 = vmin.f32 %v61, %v75
    %v78 = vmin.f32 %v62, %v76
    %v79 = vrot.slane %v77, 1
    %v80 = vrot.slane %v78, 1
    %v81 = vsel %vm47, %v79, %v80
    %v82 = vsel %vm47, %v80, %v79
    %v83 = vsel %vm37, %v81, -3.4028235e+38
    %v84 = vsel %vm38, %v82, -3.4028235e+38
    %v85 = vrot.slane %v77, 7
    %v86 = vrot.slane %v78, 7
    %v87 = vsel %vm54, %v85, %v86
    %v88 = vsel %vm54, %v86, %v85
    %v89 = vsel %vm39, %v88, -3.4028235e+38
    %v90 = vsel %vm40, %v87, -3.4028235e+38
    %v91 = vmax.f32 %v83, %v89
    %v92 = vmax.f32 %v84, %v90
    %v93 = vmax.f32 %v77, %v91
    %v94 = vmax.f32 %v78, %v92
    %95 = vrot.lane.b32.xlu0 %v93, 127
    %v96 = vpop.permute.xlu0 %95
    %97 = vrot.lane.b32.xlu0 %v94, 127
    %v98 = vpop.permute.xlu0 %97
    %v99 = vsel %vm41, %v96, -3.4028235e+38
    %v100 = vsel %vm41, %v98, -3.4028235e+38
    %101 = vrot.lane.b32.xlu0 %v93, 1
    %v102 = vpop.permute.xlu0 %101
    %103 = vrot.lane.b32.xlu0 %v94, 1
    %v104 = vpop.permute.xlu0 %103
    %v105 = vsel %vm42, %v102, -3.4028235e+38
    %v106 = vsel %vm42, %v104, -3.4028235e+38
    %v107 = vmax.f32 %v99, %v105
    %v108 = vmax.f32 %v100, %v106
    %v109 = vmax.f32 %v93, %v107
    %v110 = vmax.f32 %v94, %v108
    %v111 = vsub.f32 %v43, %v109
    %v112 = vsub.f32 %v44, %v110
    %v113 = vsel %vm37, %v81, 3.4028235e+38
    %v114 = vsel %vm38, %v82, 3.4028235e+38
    %v115 = vsel %vm39, %v88, 3.4028235e+38
    %v116 = vsel %vm40, %v87, 3.4028235e+38
    %v117 = vmin.f32 %v113, %v115
    %v118 = vmin.f32 %v114, %v116
    %v119 = vmin.f32 %v77, %v117
    %v120 = vmin.f32 %v78, %v118
    %121 = vrot.lane.b32.xlu0 %v119, 127
    %v122 = vpop.permute.xlu0 %121
    %123 = vrot.lane.b32.xlu0 %v120, 127
    %v124 = vpop.permute.xlu0 %123
    %v125 = vsel %vm41, %v122, 3.4028235e+38
    %v126 = vsel %vm41, %v124, 3.4028235e+38
    %127 = vrot.lane.b32.xlu0 %v119, 1
    %v128 = vpop.permute.xlu0 %127
    %129 = vrot.lane.b32.xlu0 %v120, 1
    %v130 = vpop.permute.xlu0 %129
    %v131 = vsel %vm42, %v128, 3.4028235e+38
    %v132 = vsel %vm42, %v130, 3.4028235e+38
    %v133 = vmin.f32 %v125, %v131
    %v134 = vmin.f32 %v126, %v132
    %v135 = vmin.f32 %v119, %v133
    %v136 = vmin.f32 %v120, %v134
    %v137 = vrot.slane %v135, 1
    %v138 = vrot.slane %v136, 1
    %v139 = vsel %vm47, %v137, %v138
    %v140 = vsel %vm47, %v138, %v137
    %v141 = vsel %vm37, %v139, -3.4028235e+38
    %v142 = vsel %vm38, %v140, -3.4028235e+38
    %v143 = vrot.slane %v135, 7
    %v144 = vrot.slane %v136, 7
    %v145 = vsel %vm54, %v143, %v144
    %v146 = vsel %vm54, %v144, %v143
    %v147 = vsel %vm39, %v146, -3.4028235e+38
    %v148 = vsel %vm40, %v145, -3.4028235e+38
    %v149 = vmax.f32 %v141, %v147
    %v150 = vmax.f32 %v142, %v148
    %v151 = vmax.f32 %v135, %v149
    %v152 = vmax.f32 %v136, %v150
    %153 = vrot.lane.b32.xlu0 %v151, 127
    %v154 = vpop.permute.xlu0 %153
    %155 = vrot.lane.b32.xlu0 %v152, 127
    %v156 = vpop.permute.xlu0 %155
    %v157 = vsel %vm41, %v154, -3.4028235e+38
    %v158 = vsel %vm41, %v156, -3.4028235e+38
    %159 = vrot.lane.b32.xlu0 %v151, 1
    %v160 = vpop.permute.xlu0 %159
    %161 = vrot.lane.b32.xlu0 %v152, 1
    %v162 = vpop.permute.xlu0 %161
    %v163 = vsel %vm42, %v160, -3.4028235e+38
    %v164 = vsel %vm42, %v162, -3.4028235e+38
    %v165 = vmax.f32 %v157, %v163
    %v166 = vmax.f32 %v158, %v164
    %v167 = vmax.f32 %v151, %v165
    %v168 = vmax.f32 %v152, %v166
    %v169 = vsub.f32 %v77, %v167
    %v170 = vsub.f32 %v78, %v168
    %v171 = vadd.f32 %v111, %v169
    %v172 = vadd.f32 %v112, %v170
    %v173 = vsel %vm37, %v139, 3.4028235e+38
    %v174 = vsel %vm38, %v140, 3.4028235e+38
    %v175 = vsel %vm39, %v146, 3.4028235e+38
    %v176 = vsel %vm40, %v145, 3.4028235e+38
    %v177 = vmin.f32 %v173, %v175
    %v178 = vmin.f32 %v174, %v176
    %v179 = vmin.f32 %v135, %v177
    %v180 = vmin.f32 %v136, %v178
    %181 = vrot.lane.b32.xlu0 %v179, 127
    %v182 = vpop.permute.xlu0 %181
    %183 = vrot.lane.b32.xlu0 %v180, 127
    %v184 = vpop.permute.xlu0 %183
    %v185 = vsel %vm41, %v182, 3.4028235e+38
    %v186 = vsel %vm41, %v184, 3.4028235e+38
    %187 = vrot.lane.b32.xlu0 %v179, 1
    %v188 = vpop.permute.xlu0 %187
    %189 = vrot.lane.b32.xlu0 %v180, 1
    %v190 = vpop.permute.xlu0 %189
    %v191 = vsel %vm42, %v188, 3.4028235e+38
    %v192 = vsel %vm42, %v190, 3.4028235e+38
    %v193 = vmin.f32 %v185, %v191
    %v194 = vmin.f32 %v186, %v192
    %v195 = vmin.f32 %v179, %v193
    %v196 = vmin.f32 %v180, %v194
    %v197 = vrot.slane %v195, 1
    %v198 = vrot.slane %v196, 1
    %v199 = vsel %vm47, %v197, %v198
    %v200 = vsel %vm47, %v198, %v197
    %v201 = vsel %vm37, %v199, -3.4028235e+38
    %v202 = vsel %vm38, %v200, -3.4028235e+38
    %v203 = vrot.slane %v195, 7
    %v204 = vrot.slane %v196, 7
    %v205 = vsel %vm54, %v203, %v204
    %v206 = vsel %vm54, %v204, %v203
    %v207 = vsel %vm39, %v206, -3.4028235e+38
    %v208 = vsel %vm40, %v205, -3.4028235e+38
    %v209 = vmax.f32 %v201, %v207
    %v210 = vmax.f32 %v202, %v208
    %v211 = vmax.f32 %v195, %v209
    %v212 = vmax.f32 %v196, %v210
    %213 = vrot.lane.b32.xlu0 %v211, 127
    %v214 = vpop.permute.xlu0 %213
    %215 = vrot.lane.b32.xlu0 %v212, 127
    %v216 = vpop.permute.xlu0 %215
    %v217 = vsel %vm41, %v214, -3.4028235e+38
    %v218 = vsel %vm41, %v216, -3.4028235e+38
    %219 = vrot.lane.b32.xlu0 %v211, 1
    %v220 = vpop.permute.xlu0 %219
    %221 = vrot.lane.b32.xlu0 %v212, 1
    %v222 = vpop.permute.xlu0 %221
    %v223 = vsel %vm42, %v220, -3.4028235e+38
    %v224 = vsel %vm42, %v222, -3.4028235e+38
    %v225 = vmax.f32 %v217, %v223
    %v226 = vmax.f32 %v218, %v224
    %v227 = vmax.f32 %v211, %v225
    %v228 = vmax.f32 %v212, %v226
    %v229 = vsub.f32 %v135, %v227
    %v230 = vsub.f32 %v136, %v228
    %v231 = vadd.f32 %v171, %v229
    %v232 = vadd.f32 %v172, %v230
    %v233 = vsel %vm37, %v199, 3.4028235e+38
    %v234 = vsel %vm38, %v200, 3.4028235e+38
    %v235 = vsel %vm39, %v206, 3.4028235e+38
    %v236 = vsel %vm40, %v205, 3.4028235e+38
    %v237 = vmin.f32 %v233, %v235
    %v238 = vmin.f32 %v234, %v236
    %v239 = vmin.f32 %v195, %v237
    %v240 = vmin.f32 %v196, %v238
    %241 = vrot.lane.b32.xlu0 %v239, 127
    %v242 = vpop.permute.xlu0 %241
    %243 = vrot.lane.b32.xlu0 %v240, 127
    %v244 = vpop.permute.xlu0 %243
    %v245 = vsel %vm41, %v242, 3.4028235e+38
    %v246 = vsel %vm41, %v244, 3.4028235e+38
    %247 = vrot.lane.b32.xlu0 %v239, 1
    %v248 = vpop.permute.xlu0 %247
    %249 = vrot.lane.b32.xlu0 %v240, 1
    %v250 = vpop.permute.xlu0 %249
    %v251 = vsel %vm42, %v248, 3.4028235e+38
    %v252 = vsel %vm42, %v250, 3.4028235e+38
    %v253 = vmin.f32 %v245, %v251
    %v254 = vmin.f32 %v246, %v252
    %v255 = vmin.f32 %v239, %v253
    %v256 = vmin.f32 %v240, %v254
    %v257 = vrot.slane %v255, 1
    %v258 = vrot.slane %v256, 1
    %v259 = vsel %vm47, %v257, %v258
    %v260 = vsel %vm47, %v258, %v257
    %v261 = vsel %vm37, %v259, -3.4028235e+38
    %v262 = vsel %vm38, %v260, -3.4028235e+38
    %v263 = vrot.slane %v255, 7
    %v264 = vrot.slane %v256, 7
    %v265 = vsel %vm54, %v263, %v264
    %v266 = vsel %vm54, %v264, %v263
    %v267 = vsel %vm39, %v266, -3.4028235e+38
    %v268 = vsel %vm40, %v265, -3.4028235e+38
    %v269 = vmax.f32 %v261, %v267
    %v270 = vmax.f32 %v262, %v268
    %v271 = vmax.f32 %v255, %v269
    %v272 = vmax.f32 %v256, %v270
    %273 = vrot.lane.b32.xlu0 %v271, 127
    %v274 = vpop.permute.xlu0 %273
    %275 = vrot.lane.b32.xlu0 %v272, 127
    %v276 = vpop.permute.xlu0 %275
    %v277 = vsel %vm41, %v274, -3.4028235e+38
    %v278 = vsel %vm41, %v276, -3.4028235e+38
    %279 = vrot.lane.b32.xlu0 %v271, 1
    %v280 = vpop.permute.xlu0 %279
    %281 = vrot.lane.b32.xlu0 %v272, 1
    %v282 = vpop.permute.xlu0 %281
    %v283 = vsel %vm42, %v280, -3.4028235e+38
    %v284 = vsel %vm42, %v282, -3.4028235e+38
    %v285 = vmax.f32 %v277, %v283
    %v286 = vmax.f32 %v278, %v284
    %v287 = vmax.f32 %v271, %v285
    %v288 = vmax.f32 %v272, %v286
    %v289 = vsub.f32 %v195, %v287
    %v290 = vsub.f32 %v196, %v288
    %v291 = vadd.f32 %v231, %v289
    %v292 = vadd.f32 %v232, %v290
    %v293 = vsel %vm37, %v259, 3.4028235e+38
    %v294 = vsel %vm38, %v260, 3.4028235e+38
    %v295 = vsel %vm39, %v266, 3.4028235e+38
    %v296 = vsel %vm40, %v265, 3.4028235e+38
    %v297 = vmin.f32 %v293, %v295
    %v298 = vmin.f32 %v294, %v296
    %v299 = vmin.f32 %v255, %v297
    %v300 = vmin.f32 %v256, %v298
    %301 = vrot.lane.b32.xlu0 %v299, 127
    %v302 = vpop.permute.xlu0 %301
    %303 = vrot.lane.b32.xlu0 %v300, 127
    %v304 = vpop.permute.xlu0 %303
    %v305 = vsel %vm41, %v302, 3.4028235e+38
    %v306 = vsel %vm41, %v304, 3.4028235e+38
    %307 = vrot.lane.b32.xlu0 %v299, 1
    %v308 = vpop.permute.xlu0 %307
    %309 = vrot.lane.b32.xlu0 %v300, 1
    %v310 = vpop.permute.xlu0 %309
    %v311 = vsel %vm42, %v308, 3.4028235e+38
    %v312 = vsel %vm42, %v310, 3.4028235e+38
    %v313 = vmin.f32 %v305, %v311
    %v314 = vmin.f32 %v306, %v312
    %v315 = vmin.f32 %v299, %v313
    %v316 = vmin.f32 %v300, %v314
    %v317 = vrot.slane %v315, 1
    %v318 = vrot.slane %v316, 1
    %v319 = vsel %vm47, %v317, %v318
    %v320 = vsel %vm47, %v318, %v317
    %v321 = vsel %vm37, %v319, -3.4028235e+38
    %v322 = vsel %vm38, %v320, -3.4028235e+38
    %v323 = vrot.slane %v315, 7
    %v324 = vrot.slane %v316, 7
    %v325 = vsel %vm54, %v323, %v324
    %v326 = vsel %vm54, %v324, %v323
    %v327 = vsel %vm39, %v326, -3.4028235e+38
    %v328 = vsel %vm40, %v325, -3.4028235e+38
    %v329 = vmax.f32 %v321, %v327
    %v330 = vmax.f32 %v322, %v328
    %v331 = vmax.f32 %v315, %v329
    %v332 = vmax.f32 %v316, %v330
    %333 = vrot.lane.b32.xlu0 %v331, 127
    %v334 = vpop.permute.xlu0 %333
    %335 = vrot.lane.b32.xlu0 %v332, 127
    %v336 = vpop.permute.xlu0 %335
    %v337 = vsel %vm41, %v334, -3.4028235e+38
    %v338 = vsel %vm41, %v336, -3.4028235e+38
    %339 = vrot.lane.b32.xlu0 %v331, 1
    %v340 = vpop.permute.xlu0 %339
    %341 = vrot.lane.b32.xlu0 %v332, 1
    %v342 = vpop.permute.xlu0 %341
    %v343 = vsel %vm42, %v340, -3.4028235e+38
    %v344 = vsel %vm42, %v342, -3.4028235e+38
    %v345 = vmax.f32 %v337, %v343
    %v346 = vmax.f32 %v338, %v344
    %v347 = vmax.f32 %v331, %v345
    %v348 = vmax.f32 %v332, %v346
    %v349 = vsub.f32 %v255, %v347
    %v350 = vsub.f32 %v256, %v348
    %v351 = vadd.f32 %v291, %v349
    %v352 = vadd.f32 %v292, %v350
    %v353 = vsel %vm37, %v319, 3.4028235e+38
    %v354 = vsel %vm38, %v320, 3.4028235e+38
    %v355 = vsel %vm39, %v326, 3.4028235e+38
    %v356 = vsel %vm40, %v325, 3.4028235e+38
    %v357 = vmin.f32 %v353, %v355
    %v358 = vmin.f32 %v354, %v356
    %v359 = vmin.f32 %v315, %v357
    %v360 = vmin.f32 %v316, %v358
    %361 = vrot.lane.b32.xlu0 %v359, 127
    %v362 = vpop.permute.xlu0 %361
    %363 = vrot.lane.b32.xlu0 %v360, 127
    %v364 = vpop.permute.xlu0 %363
    %v365 = vsel %vm41, %v362, 3.4028235e+38
    %v366 = vsel %vm41, %v364, 3.4028235e+38
    %367 = vrot.lane.b32.xlu0 %v359, 1
    %v368 = vpop.permute.xlu0 %367
    %369 = vrot.lane.b32.xlu0 %v360, 1
    %v370 = vpop.permute.xlu0 %369
    %v371 = vsel %vm42, %v368, 3.4028235e+38
    %v372 = vsel %vm42, %v370, 3.4028235e+38
    %v373 = vmin.f32 %v365, %v371
    %v374 = vmin.f32 %v366, %v372
    %v375 = vmin.f32 %v359, %v373
    %v376 = vmin.f32 %v360, %v374
    %v377 = vrot.slane %v375, 1
    %v378 = vrot.slane %v376, 1
    %v379 = vsel %vm47, %v377, %v378
    %v380 = vsel %vm47, %v378, %v377
    %v381 = vsel %vm37, %v379, -3.4028235e+38
    %v382 = vsel %vm38, %v380, -3.4028235e+38
    %v383 = vrot.slane %v375, 7
    %v384 = vrot.slane %v376, 7
    %v385 = vsel %vm54, %v383, %v384
    %v386 = vsel %vm54, %v384, %v383
    %v387 = vsel %vm39, %v386, -3.4028235e+38
    %v388 = vsel %vm40, %v385, -3.4028235e+38
    %v389 = vmax.f32 %v381, %v387
    %v390 = vmax.f32 %v382, %v388
    %v391 = vmax.f32 %v375, %v389
    %v392 = vmax.f32 %v376, %v390
    %393 = vrot.lane.b32.xlu0 %v391, 127
    %v394 = vpop.permute.xlu0 %393
    %395 = vrot.lane.b32.xlu0 %v392, 127
    %v396 = vpop.permute.xlu0 %395
    %v397 = vsel %vm41, %v394, -3.4028235e+38
    %v398 = vsel %vm41, %v396, -3.4028235e+38
    %399 = vrot.lane.b32.xlu0 %v391, 1
    %v400 = vpop.permute.xlu0 %399
    %401 = vrot.lane.b32.xlu0 %v392, 1
    %v402 = vpop.permute.xlu0 %401
    %v403 = vsel %vm42, %v400, -3.4028235e+38
    %v404 = vsel %vm42, %v402, -3.4028235e+38
    %v405 = vmax.f32 %v397, %v403
    %v406 = vmax.f32 %v398, %v404
    %v407 = vmax.f32 %v391, %v405
    %v408 = vmax.f32 %v392, %v406
    %v409 = vsub.f32 %v315, %v407
    %v410 = vsub.f32 %v316, %v408
    %v411 = vadd.f32 %v351, %v409
    %v412 = vadd.f32 %v352, %v410
    %v413 = vsel %vm37, %v379, 3.4028235e+38
    %v414 = vsel %vm38, %v380, 3.4028235e+38
    %v415 = vsel %vm39, %v386, 3.4028235e+38
    %v416 = vsel %vm40, %v385, 3.4028235e+38
    %v417 = vmin.f32 %v413, %v415
    %v418 = vmin.f32 %v414, %v416
    %v419 = vmin.f32 %v375, %v417
    %v420 = vmin.f32 %v376, %v418
    %421 = vrot.lane.b32.xlu0 %v419, 127
    %v422 = vpop.permute.xlu0 %421
    %423 = vrot.lane.b32.xlu0 %v420, 127
    %v424 = vpop.permute.xlu0 %423
    %v425 = vsel %vm41, %v422, 3.4028235e+38
    %v426 = vsel %vm41, %v424, 3.4028235e+38
    %427 = vrot.lane.b32.xlu0 %v419, 1
    %v428 = vpop.permute.xlu0 %427
    %429 = vrot.lane.b32.xlu0 %v420, 1
    %v430 = vpop.permute.xlu0 %429
    %v431 = vsel %vm42, %v428, 3.4028235e+38
    %v432 = vsel %vm42, %v430, 3.4028235e+38
    %v433 = vmin.f32 %v425, %v431
    %v434 = vmin.f32 %v426, %v432
    %v435 = vmin.f32 %v419, %v433
    %v436 = vmin.f32 %v420, %v434
    %v437 = vrot.slane %v435, 1
    %v438 = vrot.slane %v436, 1
    %v439 = vsel %vm47, %v437, %v438
    %v440 = vsel %vm47, %v438, %v437
    %v441 = vsel %vm37, %v439, -3.4028235e+38
    %v442 = vsel %vm38, %v440, -3.4028235e+38
    %v443 = vrot.slane %v435, 7
    %v444 = vrot.slane %v436, 7
    %v445 = vsel %vm54, %v443, %v444
    %v446 = vsel %vm54, %v444, %v443
    %v447 = vsel %vm39, %v446, -3.4028235e+38
    %v448 = vsel %vm40, %v445, -3.4028235e+38
    %v449 = vmax.f32 %v441, %v447
    %v450 = vmax.f32 %v442, %v448
    %v451 = vmax.f32 %v435, %v449
    %v452 = vmax.f32 %v436, %v450
    %453 = vrot.lane.b32.xlu0 %v451, 127
    %v454 = vpop.permute.xlu0 %453
    %455 = vrot.lane.b32.xlu0 %v452, 127
    %v456 = vpop.permute.xlu0 %455
    %v457 = vsel %vm41, %v454, -3.4028235e+38
    %v458 = vsel %vm41, %v456, -3.4028235e+38
    %459 = vrot.lane.b32.xlu0 %v451, 1
    %v460 = vpop.permute.xlu0 %459
    %461 = vrot.lane.b32.xlu0 %v452, 1
    %v462 = vpop.permute.xlu0 %461
    %v463 = vsel %vm42, %v460, -3.4028235e+38
    %v464 = vsel %vm42, %v462, -3.4028235e+38
    %v465 = vmax.f32 %v457, %v463
    %v466 = vmax.f32 %v458, %v464
    %v467 = vmax.f32 %v451, %v465
    %v468 = vmax.f32 %v452, %v466
    %v469 = vsub.f32 %v375, %v467
    %v470 = vsub.f32 %v376, %v468
    %v471 = vadd.f32 %v411, %v469
    %v472 = vadd.f32 %v412, %v470
    %v473 = vsel %vm37, %v439, 3.4028235e+38
    %v474 = vsel %vm38, %v440, 3.4028235e+38
    %v475 = vsel %vm39, %v446, 3.4028235e+38
    %v476 = vsel %vm40, %v445, 3.4028235e+38
    %v477 = vmin.f32 %v473, %v475
    %v478 = vmin.f32 %v474, %v476
    %v479 = vmin.f32 %v435, %v477
    %v480 = vmin.f32 %v436, %v478
    %481 = vrot.lane.b32.xlu0 %v479, 127
    %v482 = vpop.permute.xlu0 %481
    %483 = vrot.lane.b32.xlu0 %v480, 127
    %v484 = vpop.permute.xlu0 %483
    %v485 = vsel %vm41, %v482, 3.4028235e+38
    %v486 = vsel %vm41, %v484, 3.4028235e+38
    %487 = vrot.lane.b32.xlu0 %v479, 1
    %v488 = vpop.permute.xlu0 %487
    %489 = vrot.lane.b32.xlu0 %v480, 1
    %v490 = vpop.permute.xlu0 %489
    %v491 = vsel %vm42, %v488, 3.4028235e+38
    %v492 = vsel %vm42, %v490, 3.4028235e+38
    %v493 = vmin.f32 %v485, %v491
    %v494 = vmin.f32 %v486, %v492
    %v495 = vmin.f32 %v479, %v493
    %v496 = vmin.f32 %v480, %v494
    %v497 = vrot.slane %v495, 1
    %v498 = vrot.slane %v496, 1
    %v499 = vsel %vm47, %v497, %v498
    %v500 = vsel %vm47, %v498, %v497
    %v501 = vsel %vm37, %v499, -3.4028235e+38
    %v502 = vsel %vm38, %v500, -3.4028235e+38
    %v503 = vrot.slane %v495, 7
    %v504 = vrot.slane %v496, 7
    %v505 = vsel %vm54, %v503, %v504
    %v506 = vsel %vm54, %v504, %v503
    %v507 = vsel %vm39, %v506, -3.4028235e+38
    %v508 = vsel %vm40, %v505, -3.4028235e+38
    %v509 = vmax.f32 %v501, %v507
    %v510 = vmax.f32 %v502, %v508
    %v511 = vmax.f32 %v495, %v509
    %v512 = vmax.f32 %v496, %v510
    %513 = vrot.lane.b32.xlu0 %v511, 127
    %v514 = vpop.permute.xlu0 %513
    %515 = vrot.lane.b32.xlu0 %v512, 127
    %v516 = vpop.permute.xlu0 %515
    %v517 = vsel %vm41, %v514, -3.4028235e+38
    %v518 = vsel %vm41, %v516, -3.4028235e+38
    %519 = vrot.lane.b32.xlu0 %v511, 1
    %v520 = vpop.permute.xlu0 %519
    %521 = vrot.lane.b32.xlu0 %v512, 1
    %v522 = vpop.permute.xlu0 %521
    %v523 = vsel %vm42, %v520, -3.4028235e+38
    %v524 = vsel %vm42, %v522, -3.4028235e+38
    %v525 = vmax.f32 %v517, %v523
    %v526 = vmax.f32 %v518, %v524
    %v527 = vmax.f32 %v511, %v525
    %v528 = vmax.f32 %v512, %v526
    %v529 = vsub.f32 %v435, %v527
    %v530 = vsub.f32 %v436, %v528
    %v531 = vadd.f32 %v471, %v529
    %v532 = vadd.f32 %v472, %v530
    %v533 = vsel %vm37, %v499, 3.4028235e+38
    %v534 = vsel %vm38, %v500, 3.4028235e+38
    %v535 = vsel %vm39, %v506, 3.4028235e+38
    %v536 = vsel %vm40, %v505, 3.4028235e+38
    %v537 = vmin.f32 %v533, %v535
    %v538 = vmin.f32 %v534, %v536
    %v539 = vmin.f32 %v495, %v537
    %v540 = vmin.f32 %v496, %v538
    %541 = vrot.lane.b32.xlu0 %v539, 127
    %v542 = vpop.permute.xlu0 %541
    %543 = vrot.lane.b32.xlu0 %v540, 127
    %v544 = vpop.permute.xlu0 %543
    %v545 = vsel %vm41, %v542, 3.4028235e+38
    %v546 = vsel %vm41, %v544, 3.4028235e+38
    %547 = vrot.lane.b32.xlu0 %v539, 1
    %v548 = vpop.permute.xlu0 %547
    %549 = vrot.lane.b32.xlu0 %v540, 1
    %v550 = vpop.permute.xlu0 %549
    %v551 = vsel %vm42, %v548, 3.4028235e+38
    %v552 = vsel %vm42, %v550, 3.4028235e+38
    %v553 = vmin.f32 %v545, %v551
    %v554 = vmin.f32 %v546, %v552
    %v555 = vmin.f32 %v539, %v553
    %v556 = vmin.f32 %v540, %v554
    %v557 = vrot.slane %v555, 1
    %v558 = vrot.slane %v556, 1
    %v559 = vsel %vm47, %v557, %v558
    %v560 = vsel %vm47, %v558, %v557
    %v561 = vsel %vm37, %v559, -3.4028235e+38
    %v562 = vsel %vm38, %v560, -3.4028235e+38
    %v563 = vrot.slane %v555, 7
    %v564 = vrot.slane %v556, 7
    %v565 = vsel %vm54, %v563, %v564
    %v566 = vsel %vm54, %v564, %v563
    %v567 = vsel %vm39, %v566, -3.4028235e+38
    %v568 = vsel %vm40, %v565, -3.4028235e+38
    %v569 = vmax.f32 %v561, %v567
    %v570 = vmax.f32 %v562, %v568
    %v571 = vmax.f32 %v555, %v569
    %v572 = vmax.f32 %v556, %v570
    %573 = vrot.lane.b32.xlu0 %v571, 127
    %v574 = vpop.permute.xlu0 %573
    %575 = vrot.lane.b32.xlu0 %v572, 127
    %v576 = vpop.permute.xlu0 %575
    %v577 = vsel %vm41, %v574, -3.4028235e+38
    %v578 = vsel %vm41, %v576, -3.4028235e+38
    %579 = vrot.lane.b32.xlu0 %v571, 1
    %v580 = vpop.permute.xlu0 %579
    %581 = vrot.lane.b32.xlu0 %v572, 1
    %v582 = vpop.permute.xlu0 %581
    %v583 = vsel %vm42, %v580, -3.4028235e+38
    %v584 = vsel %vm42, %v582, -3.4028235e+38
    %v585 = vmax.f32 %v577, %v583
    %v586 = vmax.f32 %v578, %v584
    %v587 = vmax.f32 %v571, %v585
    %v588 = vmax.f32 %v572, %v586
    %v589 = vsub.f32 %v495, %v587
    %v590 = vsub.f32 %v496, %v588
    %v591 = vadd.f32 %v531, %v589
    %v592 = vadd.f32 %v532, %v590
    %v593 = vsel %vm37, %v559, 3.4028235e+38
    %v594 = vsel %vm38, %v560, 3.4028235e+38
    %v595 = vsel %vm39, %v566, 3.4028235e+38
    %v596 = vsel %vm40, %v565, 3.4028235e+38
    %v597 = vmin.f32 %v593, %v595
    %v598 = vmin.f32 %v594, %v596
    %v599 = vmin.f32 %v555, %v597
    %v600 = vmin.f32 %v556, %v598
    %601 = vrot.lane.b32.xlu0 %v599, 127
    %v602 = vpop.permute.xlu0 %601
    %603 = vrot.lane.b32.xlu0 %v600, 127
    %v604 = vpop.permute.xlu0 %603
    %v605 = vsel %vm41, %v602, 3.4028235e+38
    %v606 = vsel %vm41, %v604, 3.4028235e+38
    %607 = vrot.lane.b32.xlu0 %v599, 1
    %v608 = vpop.permute.xlu0 %607
    %609 = vrot.lane.b32.xlu0 %v600, 1
    %v610 = vpop.permute.xlu0 %609
    %v611 = vsel %vm42, %v608, 3.4028235e+38
    %v612 = vsel %vm42, %v610, 3.4028235e+38
    %v613 = vmin.f32 %v605, %v611
    %v614 = vmin.f32 %v606, %v612
    %v615 = vmin.f32 %v599, %v613
    %v616 = vmin.f32 %v600, %v614
    %v617 = vrot.slane %v615, 1
    %v618 = vrot.slane %v616, 1
    %v619 = vsel %vm47, %v617, %v618
    %v620 = vsel %vm47, %v618, %v617
    %v621 = vsel %vm37, %v619, -3.4028235e+38
    %v622 = vsel %vm38, %v620, -3.4028235e+38
    %v623 = vrot.slane %v615, 7
    %v624 = vrot.slane %v616, 7
    %v625 = vsel %vm54, %v623, %v624
    %v626 = vsel %vm54, %v624, %v623
    %v627 = vsel %vm39, %v626, -3.4028235e+38
    %v628 = vsel %vm40, %v625, -3.4028235e+38
    %v629 = vmax.f32 %v621, %v627
    %v630 = vmax.f32 %v622, %v628
    %v631 = vmax.f32 %v615, %v629
    %v632 = vmax.f32 %v616, %v630
    %633 = vrot.lane.b32.xlu0 %v631, 127
    %v634 = vpop.permute.xlu0 %633
    %635 = vrot.lane.b32.xlu0 %v632, 127
    %v636 = vpop.permute.xlu0 %635
    %v637 = vsel %vm41, %v634, -3.4028235e+38
    %v638 = vsel %vm41, %v636, -3.4028235e+38
    %639 = vrot.lane.b32.xlu0 %v631, 1
    %v640 = vpop.permute.xlu0 %639
    %641 = vrot.lane.b32.xlu0 %v632, 1
    %v642 = vpop.permute.xlu0 %641
    %v643 = vsel %vm42, %v640, -3.4028235e+38
    %v644 = vsel %vm42, %v642, -3.4028235e+38
    %v645 = vmax.f32 %v637, %v643
    %v646 = vmax.f32 %v638, %v644
    %v647 = vmax.f32 %v631, %v645
    %v648 = vmax.f32 %v632, %v646
    %v649 = vsub.f32 %v555, %v647
    %v650 = vsub.f32 %v556, %v648
    %v651 = vadd.f32 %v591, %v649
    %v652 = vadd.f32 %v592, %v650
    %v653 = vsel %vm37, %v619, 3.4028235e+38
    %v654 = vsel %vm38, %v620, 3.4028235e+38
    %v655 = vsel %vm39, %v626, 3.4028235e+38
    %v656 = vsel %vm40, %v625, 3.4028235e+38
    %v657 = vmin.f32 %v653, %v655
    %v658 = vmin.f32 %v654, %v656
    %v659 = vmin.f32 %v615, %v657
    %v660 = vmin.f32 %v616, %v658
    %661 = vrot.lane.b32.xlu0 %v659, 127
    %v662 = vpop.permute.xlu0 %661
    %663 = vrot.lane.b32.xlu0 %v660, 127
    %v664 = vpop.permute.xlu0 %663
    %v665 = vsel %vm41, %v662, 3.4028235e+38
    %v666 = vsel %vm41, %v664, 3.4028235e+38
    %667 = vrot.lane.b32.xlu0 %v659, 1
    %v668 = vpop.permute.xlu0 %667
    %669 = vrot.lane.b32.xlu0 %v660, 1
    %v670 = vpop.permute.xlu0 %669
    %v671 = vsel %vm42, %v668, 3.4028235e+38
    %v672 = vsel %vm42, %v670, 3.4028235e+38
    %v673 = vmin.f32 %v665, %v671
    %v674 = vmin.f32 %v666, %v672
    %v675 = vmin.f32 %v659, %v673
    %v676 = vmin.f32 %v660, %v674
    %v677 = vrot.slane %v675, 1
    %v678 = vrot.slane %v676, 1
    %v679 = vsel %vm47, %v677, %v678
    %v680 = vsel %vm47, %v678, %v677
    %v681 = vsel %vm37, %v679, -3.4028235e+38
    %v682 = vsel %vm38, %v680, -3.4028235e+38
    %v683 = vrot.slane %v675, 7
    %v684 = vrot.slane %v676, 7
    %v685 = vsel %vm54, %v683, %v684
    %v686 = vsel %vm54, %v684, %v683
    %v687 = vsel %vm39, %v686, -3.4028235e+38
    %v688 = vsel %vm40, %v685, -3.4028235e+38
    %v689 = vmax.f32 %v681, %v687
    %v690 = vmax.f32 %v682, %v688
    %v691 = vmax.f32 %v675, %v689
    %v692 = vmax.f32 %v676, %v690
    %693 = vrot.lane.b32.xlu0 %v691, 127
    %v694 = vpop.permute.xlu0 %693
    %695 = vrot.lane.b32.xlu0 %v692, 127
    %v696 = vpop.permute.xlu0 %695
    %v697 = vsel %vm41, %v694, -3.4028235e+38
    %v698 = vsel %vm41, %v696, -3.4028235e+38
    %699 = vrot.lane.b32.xlu0 %v691, 1
    %v700 = vpop.permute.xlu0 %699
    %701 = vrot.lane.b32.xlu0 %v692, 1
    %v702 = vpop.permute.xlu0 %701
    %v703 = vsel %vm42, %v700, -3.4028235e+38
    %v704 = vsel %vm42, %v702, -3.4028235e+38
    %v705 = vmax.f32 %v697, %v703
    %v706 = vmax.f32 %v698, %v704
    %v707 = vmax.f32 %v691, %v705
    %v708 = vmax.f32 %v692, %v706
    %v709 = vsub.f32 %v615, %v707
    %v710 = vsub.f32 %v616, %v708
    %v711 = vadd.f32 %v651, %v709
    %v712 = vadd.f32 %v652, %v710
    %713 = vst [vmem:[#allocation5] sm:$0xff] %v711
    %714 = vst [vmem:[#allocation5 + $0x8] sm:$0xff] %v712
    // Predicated region
    $region10: #{tpu_custom_call.1} parent=1 // pred_check
      _
    $region11: #{tpu_custom_call.1} parent=1 // pred_check_branch
      %716 = sbr.rel (0) target = $region13
    $region12: #{tpu_custom_call.1} parent=1 // pred_region
      %s718 = ssub.s32 256, 256
      %719 = vsyncadd [#allocation4], %s718
      %s720 = sshll.u32 [#allocation5], 4
      %s721 = int_to_ptr.vmem [resolvable:$true] %s720
      %726 = dma.vmem_to_hbm [thread:$0]  %s721, 256, %s1, [#allocation4], 128, 128, 8
    $region13: #{tpu_custom_call.1} parent=1 // pred_fallthru
      _
    // Predicated region
    $region14: #{tpu_custom_call.1} parent=1 // pred_check
      _
    $region15: #{tpu_custom_call.1} parent=1 // pred_check_branch
      %728 = sbr.rel (0) target = $region17
    $region16: #{tpu_custom_call.1} parent=1 // pred_region
      %729 = dma.done [#allocation4], 256
    $region17: #{tpu_custom_call.1} parent=1 // pred_fallthru
      _
    %730 = vsyncpa [#allocation3], 1
    %731 = vsyncpa [#allocation4], 1

</llo_original>
